<compile_context>
chip_gen: v5e
topology: v5e:2x2
jax: 0.10.0
libtpu: 0.0.40
codegen_flags: <defaults>
</compile_context>

<pallas_src>
import math

import jax
import jax.numpy as jnp
from jax.experimental import pallas as pl
from jax.experimental.pallas import tpu as pltpu


# ----------------------------------------------------------------------------- kernel ---
def basemodel_kernel(wq_ref,    # [T, Bt, E]  bf16  embedded question, time-major
                     v_ref,     # [Bt, N, V]  bf16  object features
                     wih_ref,   # [E, 3H]     bf16  fused GRU input weights  (r|z|n)
                     whh_ref,   # [H, 3H]     bf16  fused GRU hidden weights (r|z|n)
                     bih_ref,   # [1, 3H]     f32
                     bhh_ref,   # [1, 3H]     f32
                     wav_ref,   # [V, H]      bf16  attention: v projection
                     waq_ref,   # [H, H]      bf16  attention: q projection
                     ba_ref,    # [1, H]      f32
                     wlin_ref,  # [1, H]      f32   attention logit vector (lane-dense)
                     wqn_ref,   # [H, H]      bf16  q_net
                     bqn_ref,   # [1, H]      f32
                     wvn_ref,   # [V, H]      bf16  v_net
                     bvn_ref,   # [1, H]      f32
                     out_ref,   # [Bt, H]     f32
                     xproj_ref,  # [T, Bt, 3H] bf16  scratch: hoisted x @ W_i + b_i
                     vproj_ref,  # [Bt, N, H]  f32   scratch: v @ Wav + ba (GRU-independent)
                     ):
    T, Bt, _ = wq_ref.shape
    H = whh_ref.shape[0]
    cdt = whh_ref.dtype  # matmul compute dtype (bf16)

    # --- Attention v-projection FIRST: it does not depend on the GRU, so issuing it before
    # the recurrence lets its (dominant) MXU work hide the latency of the serial h@Wh chain.
    vproj_ref[...] = (
        jnp.einsum('bnv,vh->bnh', v_ref[...], wav_ref[...],
                   preferred_element_type=jnp.float32)
        + ba_ref[...])                                                 # [Bt, N, H] f32

    # --- GRU input projection hoisted out of the recurrence: one big matmul, stored bf16 ---
    xproj_ref[...] = (
        jnp.einsum('tbe,eg->tbg', wq_ref[...], wih_ref[...],
                   preferred_element_type=jnp.float32)
        + bih_ref[...]).astype(xproj_ref.dtype)                        # [T, Bt, 3H]

    # --- GRU recurrence: only h @ W_h (fused 3H-wide) stays on the serial chain -----------
    def gru_step(t, h):
        gi = xproj_ref[t].astype(jnp.float32)                          # [Bt, 3H]
        gh = (jnp.dot(h.astype(cdt), whh_ref[...],
                      preferred_element_type=jnp.float32)
              + bhh_ref[...])                                          # [Bt, 3H]
        r = jax.nn.sigmoid(gi[:, :H] + gh[:, :H])
        z = jax.nn.sigmoid(gi[:, H:2 * H] + gh[:, H:2 * H])
        n = jnp.tanh(gi[:, 2 * H:] + r * gh[:, 2 * H:])
        return (1.0 - z) * n + z * h

    q_h = jax.lax.fori_loop(0, T, gru_step,
                            jnp.zeros((Bt, H), jnp.float32),
                            unroll=(True if T <= 16 else 4))           # [Bt, H] f32

    # --- Attention: lane-dense [Bt, N] logits, softmax over objects ------------------------
    q_proj = jnp.dot(q_h.astype(cdt), waq_ref[...],
                     preferred_element_type=jnp.float32)               # [Bt, H]
    joint = jax.nn.relu(vproj_ref[...] + q_proj[:, None, :])           # [Bt, N, H]
    logits = jnp.sum(joint * wlin_ref[...], axis=-1)                   # [Bt, N] (N on lanes)
    # blin is a constant added to every logit -> cancelled by softmax; intentionally dropped.
    m = jnp.max(logits, axis=-1, keepdims=True)
    e = jnp.exp(logits - m)
    s = jnp.sum(e, axis=-1, keepdims=True)
    att = e * pl.reciprocal(s, approx=True)                            # [Bt, N] f32

    # (att * v).sum(1) on the VPU/XLU (f32 accumulate). An M=1 batched matmul here would
    # waste 127/255 of the MXU rows and reload the [N,V] RHS once per batch element.
    v_emb = jnp.sum(att[:, :, None] * v_ref[...].astype(jnp.float32),
                    axis=1)                                            # [Bt, V] f32

    # --- q_net / v_net (FCNet: Linear + ReLU) and multiplicative fusion --------------------
    q_repr = jax.nn.relu(jnp.dot(q_h.astype(cdt), wqn_ref[...],
                                 preferred_element_type=jnp.float32) + bqn_ref[...])
    v_repr = jax.nn.relu(jnp.dot(v_emb.astype(cdt), wvn_ref[...],
                                 preferred_element_type=jnp.float32) + bvn_ref[...])
    out_ref[...] = q_repr * v_repr


# ---------------------------------------------------------------------------- wrapper ---
def _vmem_capacity_bytes():
    """Per-core VMEM capacity; conservative 64 MiB (v7x) fallback if the query fails."""
    try:
        return int(pltpu.get_tpu_info().vmem_capacity_bytes)
    except Exception:
        return 64 << 20


def base_model_forward(v, q, params, *, batch_tile=None, compute_dtype=jnp.bfloat16):
    """v: [B, N, V] float32 object features, q: [B, T] int32 token ids."""
    B, N, V = v.shape
    T = q.shape[1]
    E = params['emb_table'].shape[1]
    H = params['whh'].shape[2]

    vmem_cap = _vmem_capacity_bytes()

    if batch_tile is None:
        # Generation-aware: 128-row tiles fit the 128 MiB VMEM of v5e/v6e; v7x (64 MiB)
        # needs 64-row tiles at production shapes.
        max_tile = 128 if vmem_cap >= (100 << 20) else 64
        batch_tile = min(B, max_tile)
        # Prefer >=2 grid steps so the "parallel" batch axis can shard across the two
        # TensorCores of a v7x chip (no cost on v5e/v6e).  Keep the tile 8-row aligned.
        if pl.cdiv(B, batch_tile) < 2 and B >= 16 and (B // 2) % 8 == 0:
            batch_tile = B // 2

    # Fuse the three GRU gates (r|z|n) along the output axis -> single matmul per operand.
    wih = jnp.concatenate([params['wih'][g] for g in range(3)], axis=1).astype(compute_dtype)  # [E,3H]
    whh = jnp.concatenate([params['whh'][g] for g in range(3)], axis=1).astype(compute_dtype)  # [H,3H]
    bih = jnp.concatenate([params['bih'][g] for g in range(3)], axis=1)                        # [1,3H]
    bhh = jnp.concatenate([params['bhh'][g] for g in range(3)], axis=1)                        # [1,3H]

    wav = params['wav'].astype(compute_dtype)
    waq = params['waq'].astype(compute_dtype)
    wqn = params['wqn'].astype(compute_dtype)
    wvn = params['wvn'].astype(compute_dtype)
    wlin = params['wlin'].reshape(1, H)   # lane-dense logit vector; blin dropped (softmax-invariant)

    # TODO(synk): the embedding gather is a data-dependent row lookup done in plain JAX;
    # it is not expressible as a rectangular BlockSpec tile (could become an in-kernel
    # PrefetchScalarGridSpec + per-row DMA if it ever dominates HBM traffic).
    # Gather directly time-major and in bf16: no separate [B,T,E] f32 transpose pass.
    wq_tbe = jnp.take(params['emb_table'].astype(compute_dtype), q.T, axis=0)  # [T, B, E]
    v_c = v.astype(compute_dtype)

    kernel_inputs = (
        wq_tbe, v_c, wih, whh, bih, bhh,
        wav, waq, params['ba'], wlin,
        wqn, params['bqn'], wvn, params['bvn'],
    )

    def resident(x):  # weights/biases: one full block, index_map -> 0 => stays in VMEM
        nd = x.ndim
        return pl.BlockSpec(x.shape, lambda b, _nd=nd: (0,) * _nd)

    in_specs = [
        pl.BlockSpec((T, batch_tile, E), lambda b: (0, b, 0)),   # question activations (batch-tiled)
        pl.BlockSpec((batch_tile, N, V), lambda b: (b, 0, 0)),   # object features (batch-tiled)
    ] + [resident(x) for x in kernel_inputs[2:]]

    grid = (pl.cdiv(B, batch_tile),)

    # --- VMEM budget for the chosen tiles (double-buffered streams + resident weights +
    # scratches), with headroom; the default scoped limit (16/32 MiB) would otherwise cap
    # the intended tile sizes at production shapes.
    bf16_b, f32_b = 2, 4
    tile_bytes = (
        2 * (T * batch_tile * E * bf16_b)          # wq tile, double-buffered
        + 2 * (batch_tile * N * V * bf16_b)        # v tile, double-buffered
        + 2 * (batch_tile * H * f32_b)             # out tile, double-buffered
        + (T * batch_tile * 3 * H * bf16_b)        # xproj scratch (bf16)
        + (batch_tile * N * H * f32_b)             # vproj scratch (f32)
    )
    weight_bytes = sum(x.size * jnp.dtype(x.dtype).itemsize for x in kernel_inputs[2:])
    vmem_limit = int((tile_bytes + 2 * weight_bytes) * 1.3) + (8 << 20)
    vmem_limit = max(vmem_limit, 32 << 20)
    vmem_limit = min(vmem_limit, vmem_cap - (2 << 20))

    return pl.pallas_call(
        basemodel_kernel,
        out_shape=jax.ShapeDtypeStruct((B, H), jnp.float32),
        grid_spec=pltpu.PrefetchScalarGridSpec(
            num_scalar_prefetch=0,
            grid=grid,
            in_specs=in_specs,
            out_specs=pl.BlockSpec((batch_tile, H), lambda b: (b, 0)),
            scratch_shapes=[
                pltpu.VMEM((T, batch_tile, 3 * H), compute_dtype),   # xproj (bf16)
                pltpu.VMEM((batch_tile, N, H), jnp.float32),         # vproj (f32)
            ],
        ),
        compiler_params=pltpu.CompilerParams(
            dimension_semantics=("parallel",),   # batch tiles shard across cores on v7x
            vmem_limit_bytes=vmem_limit,
        ),
    )(*kernel_inputs)


# ------------------------------------------------------------------------- reference ----
def reference_forward(v, q, params):
    """Pure-JAX f32 reference with identical semantics (incl. blin, which cancels)."""
    H = params['whh'].shape[2]
    w_emb = jnp.take(params['emb_table'], q, axis=0)                   # [B, T, E]
    B = w_emb.shape[0]

    def gru_step(h, x):
        r = jax.nn.sigmoid(x @ params['wih'][0] + params['bih'][0]
                           + h @ params['whh'][0] + params['bhh'][0])
        z = jax.nn.sigmoid(x @ params['wih'][1] + params['bih'][1]
                           + h @ params['whh'][1] + params['bhh'][1])
        n = jnp.tanh(x @ params['wih'][2] + params['bih'][2]
                     + r * (h @ params['whh'][2] + params['bhh'][2]))
        return (1.0 - z) * n + z * h, None

    q_h, _ = jax.lax.scan(gru_step, jnp.zeros((B, H), jnp.float32),
                          jnp.transpose(w_emb, (1, 0, 2)))
    joint = jax.nn.relu(jnp.einsum('bnv,vh->bnh', v, params['wav'])
                        + (q_h @ params['waq'])[:, None, :] + params['ba'])
    logits = jnp.einsum('bnh,hk->bnk', joint, params['wlin']) + params['blin']
    att = jax.nn.softmax(logits, axis=1)                               # [B, N, 1]
    v_emb = jnp.sum(att * v, axis=1)
    q_repr = jax.nn.relu(q_h @ params['wqn'] + params['bqn'])
    v_repr = jax.nn.relu(v_emb @ params['wvn'] + params['bvn'])
    return q_repr * v_repr


def init_params(key, vocab=50, E=32, H=32, V=32):
    ks = jax.random.split(key, 16)
    s = 0.1
    return {
        'emb_table': s * jax.random.normal(ks[0], (vocab, E), jnp.float32),
        'wih': s * jax.random.normal(ks[1], (3, E, H), jnp.float32),
        'whh': s * jax.random.normal(ks[2], (3, H, H), jnp.float32),
        'bih': s * jax.random.normal(ks[3], (3, 1, H), jnp.float32),
        'bhh': s * jax.random.normal(ks[4], (3, 1, H), jnp.float32),
        'wav': s * jax.random.normal(ks[5], (V, H), jnp.float32),
        'waq': s * jax.random.normal(ks[6], (H, H), jnp.float32),
        'ba':  s * jax.random.normal(ks[7], (1, H), jnp.float32),
        'wlin': s * jax.random.normal(ks[8], (H, 1), jnp.float32),
        'blin': s * jax.random.normal(ks[9], (1, 1), jnp.float32),
        'wqn': s * jax.random.normal(ks[10], (H, H), jnp.float32),
        'bqn': s * jax.random.normal(ks[11], (1, H), jnp.float32),
        'wvn': s * jax.random.normal(ks[12], (V, H), jnp.float32),
        'bvn': s * jax.random.normal(ks[13], (1, H), jnp.float32),
    }


if __name__ == "__main__":
    B, T, N, V, E, H, vocab = 2, 8, 8, 32, 32, 32, 50

    key = jax.random.PRNGKey(0)
    k_v, k_q, k_p = jax.random.split(key, 3)

    v = jax.random.normal(k_v, (B, N, V), jnp.float32)
    q = jax.random.randint(k_q, (B, T), 0, vocab, jnp.int32)
    params = init_params(k_p, vocab=vocab, E=E, H=H, V=V)

    out = jax.jit(base_model_forward)(v, q, params)
    out = jax.block_until_ready(out)

    assert out.shape == (B, H) and out.dtype == jnp.float32
    assert bool(jnp.all(jnp.isfinite(out)))

    ref = reference_forward(v, q, params)
    max_err = float(jnp.max(jnp.abs(out - ref)))
    assert max_err < 3e-2, f"kernel vs reference max abs err {max_err}"

    print("KERNEL_OK")
</pallas_src>

<mosaic_0001>
module attributes {stable_mosaic.version = 11 : i64} {
  func.func @basemodel_kernel(%arg0: i32, %arg1: memref<8x2x32xbf16, #tpu.memory_space<vmem>>, %arg2: memref<2x8x32xbf16, #tpu.memory_space<vmem>>, %arg3: memref<32x96xbf16, #tpu.memory_space<vmem>>, %arg4: memref<32x96xbf16, #tpu.memory_space<vmem>>, %arg5: memref<1x96xf32, #tpu.memory_space<vmem>>, %arg6: memref<1x96xf32, #tpu.memory_space<vmem>>, %arg7: memref<32x32xbf16, #tpu.memory_space<vmem>>, %arg8: memref<32x32xbf16, #tpu.memory_space<vmem>>, %arg9: memref<1x32xf32, #tpu.memory_space<vmem>>, %arg10: memref<1x32xf32, #tpu.memory_space<vmem>>, %arg11: memref<32x32xbf16, #tpu.memory_space<vmem>>, %arg12: memref<1x32xf32, #tpu.memory_space<vmem>>, %arg13: memref<32x32xbf16, #tpu.memory_space<vmem>>, %arg14: memref<1x32xf32, #tpu.memory_space<vmem>>, %arg15: memref<2x32xf32, #tpu.memory_space<vmem>>, %arg16: memref<8x2x96xbf16, #tpu.memory_space<vmem>>, %arg17: memref<2x8x32xf32, #tpu.memory_space<vmem>>) attributes {dimension_semantics = [#tpu.dimension_semantics<parallel>], iteration_bounds = array<i64: 1>, scalar_prefetch = 0 : i64, scratch_operands = 2 : i64, tpu.core_type = #tpu.core_type<tc>, window_params = [{transform_indices = @transform_0, window_bounds = array<i64: 8, 2, 32>}, {transform_indices = @transform_1, window_bounds = array<i64: 2, 8, 32>}, {pipeline_mode = #tpu.pipeline_mode<synchronous>, transform_indices = @transform_2, window_bounds = array<i64: 32, 96>}, {pipeline_mode = #tpu.pipeline_mode<synchronous>, transform_indices = @transform_3, window_bounds = array<i64: 32, 96>}, {pipeline_mode = #tpu.pipeline_mode<synchronous>, transform_indices = @transform_4, window_bounds = array<i64: 1, 96>}, {pipeline_mode = #tpu.pipeline_mode<synchronous>, transform_indices = @transform_5, window_bounds = array<i64: 1, 96>}, {pipeline_mode = #tpu.pipeline_mode<synchronous>, transform_indices = @transform_6, window_bounds = array<i64: 32, 32>}, {pipeline_mode = #tpu.pipeline_mode<synchronous>, transform_indices = @transform_7, window_bounds = array<i64: 32, 32>}, {pipeline_mode = #tpu.pipeline_mode<synchronous>, transform_indices = @transform_8, window_bounds = array<i64: 1, 32>}, {pipeline_mode = #tpu.pipeline_mode<synchronous>, transform_indices = @transform_9, window_bounds = array<i64: 1, 32>}, {pipeline_mode = #tpu.pipeline_mode<synchronous>, transform_indices = @transform_10, window_bounds = array<i64: 32, 32>}, {pipeline_mode = #tpu.pipeline_mode<synchronous>, transform_indices = @transform_11, window_bounds = array<i64: 1, 32>}, {pipeline_mode = #tpu.pipeline_mode<synchronous>, transform_indices = @transform_12, window_bounds = array<i64: 32, 32>}, {pipeline_mode = #tpu.pipeline_mode<synchronous>, transform_indices = @transform_13, window_bounds = array<i64: 1, 32>}, {transform_indices = @transform_14, window_bounds = array<i64: 2, 32>}]} {
    %c0 = arith.constant 0 : index
    %c0_0 = arith.constant 0 : index
    %c0_1 = arith.constant 0 : index
    %0 = vector.load %arg2[%c0, %c0_0, %c0_1] : memref<2x8x32xbf16, #tpu.memory_space<vmem>>, vector<2x8x32xbf16>
    %c0_2 = arith.constant 0 : index
    %c0_3 = arith.constant 0 : index
    %1 = vector.load %arg7[%c0_2, %c0_3] : memref<32x32xbf16, #tpu.memory_space<vmem>>, vector<32x32xbf16>
    "tpu.trace_start"() <{level = 10 : i32, message = "bnv,vh->bnh"}> : () -> ()
    %cst = arith.constant dense<0.000000e+00> : vector<2x8x32xf32>
    %2 = tpu.matmul %0, %1, %cst {dimension_numbers = #tpu.dot_dimension_numbers<[2], [0], [0, 1], [1], [0, 0, 0, 1, 1, 1], [], []>} : vector<2x8x32xbf16>, vector<32x32xbf16>, vector<2x8x32xf32> -> vector<2x8x32xf32>
    "tpu.trace_stop"() : () -> ()
    %c0_4 = arith.constant 0 : index
    %c0_5 = arith.constant 0 : index
    %3 = vector.load %arg9[%c0_4, %c0_5] : memref<1x32xf32, #tpu.memory_space<vmem>>, vector<1x32xf32>
    %4 = vector.shape_cast %3 : vector<1x32xf32> to vector<1x1x32xf32>
    %5 = vector.broadcast %4 : vector<1x1x32xf32> to vector<2x8x32xf32>
    %6 = arith.addf %2, %5 : vector<2x8x32xf32>
    %c0_6 = arith.constant 0 : index
    %c0_7 = arith.constant 0 : index
    %c0_8 = arith.constant 0 : index
    %7 = vector.load %arg17[%c0_6, %c0_7, %c0_8] : memref<2x8x32xf32, #tpu.memory_space<vmem>>, vector<2x8x32xf32>
    tpu.vector_store %arg17[%c0_6, %c0_7, %c0_8], %6 {strides = array<i32>} : memref<2x8x32xf32, #tpu.memory_space<vmem>>, vector<2x8x32xf32>,
    %c0_9 = arith.constant 0 : index
    %c0_10 = arith.constant 0 : index
    %c0_11 = arith.constant 0 : index
    %8 = vector.load %arg1[%c0_9, %c0_10, %c0_11] : memref<8x2x32xbf16, #tpu.memory_space<vmem>>, vector<8x2x32xbf16>
    %c0_12 = arith.constant 0 : index
    %c0_13 = arith.constant 0 : index
    %9 = vector.load %arg3[%c0_12, %c0_13] : memref<32x96xbf16, #tpu.memory_space<vmem>>, vector<32x96xbf16>
    "tpu.trace_start"() <{level = 10 : i32, message = "tbe,eg->tbg"}> : () -> ()
    %cst_14 = arith.constant dense<0.000000e+00> : vector<8x2x96xf32>
    %10 = tpu.matmul %8, %9, %cst_14 {dimension_numbers = #tpu.dot_dimension_numbers<[2], [0], [0, 1], [1], [0, 0, 0, 1, 1, 1], [], []>} : vector<8x2x32xbf16>, vector<32x96xbf16>, vector<8x2x96xf32> -> vector<8x2x96xf32>
    "tpu.trace_stop"() : () -> ()
    %c0_15 = arith.constant 0 : index
    %c0_16 = arith.constant 0 : index
    %11 = vector.load %arg5[%c0_15, %c0_16] : memref<1x96xf32, #tpu.memory_space<vmem>>, vector<1x96xf32>
    %12 = vector.shape_cast %11 : vector<1x96xf32> to vector<1x1x96xf32>
    %13 = vector.broadcast %12 : vector<1x1x96xf32> to vector<8x2x96xf32>
    %14 = arith.addf %10, %13 : vector<8x2x96xf32>
    %15 = arith.truncf %14 : vector<8x2x96xf32> to vector<8x2x96xbf16>
    %c0_17 = arith.constant 0 : index
    %c0_18 = arith.constant 0 : index
    %c0_19 = arith.constant 0 : index
    %16 = vector.load %arg16[%c0_17, %c0_18, %c0_19] : memref<8x2x96xbf16, #tpu.memory_space<vmem>>, vector<8x2x96xbf16>
    tpu.vector_store %arg16[%c0_17, %c0_18, %c0_19], %15 {strides = array<i32>} : memref<8x2x96xbf16, #tpu.memory_space<vmem>>, vector<8x2x96xbf16>,
    %cst_20 = arith.constant 0.000000e+00 : f32
    %17 = vector.broadcast %cst_20 : f32 to vector<2x32xf32>
    %c0_i32 = arith.constant 0 : i32
    %18 = arith.index_cast %c0_i32 : i32 to index
    %c0_21 = arith.constant 0 : index
    %c0_22 = arith.constant 0 : index
    %19 = vector.load %arg16[%18, %c0_21, %c0_22] : memref<8x2x96xbf16, #tpu.memory_space<vmem>>, vector<1x2x96xbf16>
    %20 = vector.shape_cast %19 : vector<1x2x96xbf16> to vector<2x96xbf16>
    %21 = arith.extf %20 : vector<2x96xbf16> to vector<2x96xf32>
    %22 = arith.truncf %17 : vector<2x32xf32> to vector<2x32xbf16>
    %c0_23 = arith.constant 0 : index
    %c0_24 = arith.constant 0 : index
    %23 = vector.load %arg4[%c0_23, %c0_24] : memref<32x96xbf16, #tpu.memory_space<vmem>>, vector<32x96xbf16>
    %cst_25 = arith.constant dense<0.000000e+00> : vector<2x96xf32>
    %24 = tpu.matmul %22, %23, %cst_25 {dimension_numbers = #tpu.dot_dimension_numbers<[1], [0], [0], [1], [0, 0, 1, 1], [], []>} : vector<2x32xbf16>, vector<32x96xbf16>, vector<2x96xf32> -> vector<2x96xf32>
    %c0_26 = arith.constant 0 : index
    %c0_27 = arith.constant 0 : index
    %25 = vector.load %arg6[%c0_26, %c0_27] : memref<1x96xf32, #tpu.memory_space<vmem>>, vector<1x96xf32>
    %26 = vector.broadcast %25 : vector<1x96xf32> to vector<2x96xf32>
    %27 = arith.addf %24, %26 : vector<2x96xf32>
    %28 = vector.extract_strided_slice %21 {offsets = [0, 0], sizes = [2, 32], strides = [1, 1]} : vector<2x96xf32> to vector<2x32xf32>
    %29 = vector.extract_strided_slice %27 {offsets = [0, 0], sizes = [2, 32], strides = [1, 1]} : vector<2x96xf32> to vector<2x32xf32>
    %30 = arith.addf %28, %29 : vector<2x32xf32>
    %31 = arith.negf %30 : vector<2x32xf32>
    %32 = math.exp %31 : vector<2x32xf32>
    %cst_28 = arith.constant 1.000000e+00 : f32
    %33 = vector.broadcast %cst_28 : f32 to vector<2x32xf32>
    %34 = arith.addf %33, %32 : vector<2x32xf32>
    %35 = arith.divf %33, %34 : vector<2x32xf32>
    %36 = vector.extract_strided_slice %21 {offsets = [0, 32], sizes = [2, 32], strides = [1, 1]} : vector<2x96xf32> to vector<2x32xf32>
    %37 = vector.extract_strided_slice %27 {offsets = [0, 32], sizes = [2, 32], strides = [1, 1]} : vector<2x96xf32> to vector<2x32xf32>
    %38 = arith.addf %36, %37 : vector<2x32xf32>
    %39 = arith.negf %38 : vector<2x32xf32>
    %40 = math.exp %39 : vector<2x32xf32>
    %cst_29 = arith.constant 1.000000e+00 : f32
    %41 = vector.broadcast %cst_29 : f32 to vector<2x32xf32>
    %42 = arith.addf %41, %40 : vector<2x32xf32>
    %43 = arith.divf %41, %42 : vector<2x32xf32>
    %44 = vector.extract_strided_slice %21 {offsets = [0, 64], sizes = [2, 32], strides = [1, 1]} : vector<2x96xf32> to vector<2x32xf32>
    %45 = vector.extract_strided_slice %27 {offsets = [0, 64], sizes = [2, 32], strides = [1, 1]} : vector<2x96xf32> to vector<2x32xf32>
    %46 = arith.mulf %35, %45 : vector<2x32xf32>
    %47 = arith.addf %44, %46 : vector<2x32xf32>
    %48 = math.tanh %47 : vector<2x32xf32>
    %cst_30 = arith.constant 1.000000e+00 : f32
    %49 = vector.broadcast %cst_30 : f32 to vector<2x32xf32>
    %50 = arith.subf %49, %43 : vector<2x32xf32>
    %51 = arith.mulf %50, %48 : vector<2x32xf32>
    %52 = arith.mulf %43, %17 : vector<2x32xf32>
    %53 = arith.addf %51, %52 : vector<2x32xf32>
    %c1_i32 = arith.constant 1 : i32
    %54 = arith.index_cast %c1_i32 : i32 to index
    %c0_31 = arith.constant 0 : index
    %c0_32 = arith.constant 0 : index
    %55 = vector.load %arg16[%54, %c0_31, %c0_32] : memref<8x2x96xbf16, #tpu.memory_space<vmem>>, vector<1x2x96xbf16>
    %56 = vector.shape_cast %55 : vector<1x2x96xbf16> to vector<2x96xbf16>
    %57 = arith.extf %56 : vector<2x96xbf16> to vector<2x96xf32>
    %58 = arith.truncf %53 : vector<2x32xf32> to vector<2x32xbf16>
    %c0_33 = arith.constant 0 : index
    %c0_34 = arith.constant 0 : index
    %59 = vector.load %arg4[%c0_33, %c0_34] : memref<32x96xbf16, #tpu.memory_space<vmem>>, vector<32x96xbf16>
    %cst_35 = arith.constant dense<0.000000e+00> : vector<2x96xf32>
    %60 = tpu.matmul %58, %59, %cst_35 {dimension_numbers = #tpu.dot_dimension_numbers<[1], [0], [0], [1], [0, 0, 1, 1], [], []>} : vector<2x32xbf16>, vector<32x96xbf16>, vector<2x96xf32> -> vector<2x96xf32>
    %c0_36 = arith.constant 0 : index
    %c0_37 = arith.constant 0 : index
    %61 = vector.load %arg6[%c0_36, %c0_37] : memref<1x96xf32, #tpu.memory_space<vmem>>, vector<1x96xf32>
    %62 = vector.broadcast %61 : vector<1x96xf32> to vector<2x96xf32>
    %63 = arith.addf %60, %62 : vector<2x96xf32>
    %64 = vector.extract_strided_slice %57 {offsets = [0, 0], sizes = [2, 32], strides = [1, 1]} : vector<2x96xf32> to vector<2x32xf32>
    %65 = vector.extract_strided_slice %63 {offsets = [0, 0], sizes = [2, 32], strides = [1, 1]} : vector<2x96xf32> to vector<2x32xf32>
    %66 = arith.addf %64, %65 : vector<2x32xf32>
    %67 = arith.negf %66 : vector<2x32xf32>
    %68 = math.exp %67 : vector<2x32xf32>
    %cst_38 = arith.constant 1.000000e+00 : f32
    %69 = vector.broadcast %cst_38 : f32 to vector<2x32xf32>
    %70 = arith.addf %69, %68 : vector<2x32xf32>
    %71 = arith.divf %69, %70 : vector<2x32xf32>
    %72 = vector.extract_strided_slice %57 {offsets = [0, 32], sizes = [2, 32], strides = [1, 1]} : vector<2x96xf32> to vector<2x32xf32>
    %73 = vector.extract_strided_slice %63 {offsets = [0, 32], sizes = [2, 32], strides = [1, 1]} : vector<2x96xf32> to vector<2x32xf32>
    %74 = arith.addf %72, %73 : vector<2x32xf32>
    %75 = arith.negf %74 : vector<2x32xf32>
    %76 = math.exp %75 : vector<2x32xf32>
    %cst_39 = arith.constant 1.000000e+00 : f32
    %77 = vector.broadcast %cst_39 : f32 to vector<2x32xf32>
    %78 = arith.addf %77, %76 : vector<2x32xf32>
    %79 = arith.divf %77, %78 : vector<2x32xf32>
    %80 = vector.extract_strided_slice %57 {offsets = [0, 64], sizes = [2, 32], strides = [1, 1]} : vector<2x96xf32> to vector<2x32xf32>
    %81 = vector.extract_strided_slice %63 {offsets = [0, 64], sizes = [2, 32], strides = [1, 1]} : vector<2x96xf32> to vector<2x32xf32>
    %82 = arith.mulf %71, %81 : vector<2x32xf32>
    %83 = arith.addf %80, %82 : vector<2x32xf32>
    %84 = math.tanh %83 : vector<2x32xf32>
    %cst_40 = arith.constant 1.000000e+00 : f32
    %85 = vector.broadcast %cst_40 : f32 to vector<2x32xf32>
    %86 = arith.subf %85, %79 : vector<2x32xf32>
    %87 = arith.mulf %86, %84 : vector<2x32xf32>
    %88 = arith.mulf %79, %53 : vector<2x32xf32>
    %89 = arith.addf %87, %88 : vector<2x32xf32>
    %c2_i32 = arith.constant 2 : i32
    %90 = arith.index_cast %c2_i32 : i32 to index
    %c0_41 = arith.constant 0 : index
    %c0_42 = arith.constant 0 : index
    %91 = vector.load %arg16[%90, %c0_41, %c0_42] : memref<8x2x96xbf16, #tpu.memory_space<vmem>>, vector<1x2x96xbf16>
    %92 = vector.shape_cast %91 : vector<1x2x96xbf16> to vector<2x96xbf16>
    %93 = arith.extf %92 : vector<2x96xbf16> to vector<2x96xf32>
    %94 = arith.truncf %89 : vector<2x32xf32> to vector<2x32xbf16>
    %c0_43 = arith.constant 0 : index
    %c0_44 = arith.constant 0 : index
    %95 = vector.load %arg4[%c0_43, %c0_44] : memref<32x96xbf16, #tpu.memory_space<vmem>>, vector<32x96xbf16>
    %cst_45 = arith.constant dense<0.000000e+00> : vector<2x96xf32>
    %96 = tpu.matmul %94, %95, %cst_45 {dimension_numbers = #tpu.dot_dimension_numbers<[1], [0], [0], [1], [0, 0, 1, 1], [], []>} : vector<2x32xbf16>, vector<32x96xbf16>, vector<2x96xf32> -> vector<2x96xf32>
    %c0_46 = arith.constant 0 : index
    %c0_47 = arith.constant 0 : index
    %97 = vector.load %arg6[%c0_46, %c0_47] : memref<1x96xf32, #tpu.memory_space<vmem>>, vector<1x96xf32>
    %98 = vector.broadcast %97 : vector<1x96xf32> to vector<2x96xf32>
    %99 = arith.addf %96, %98 : vector<2x96xf32>
    %100 = vector.extract_strided_slice %93 {offsets = [0, 0], sizes = [2, 32], strides = [1, 1]} : vector<2x96xf32> to vector<2x32xf32>
    %101 = vector.extract_strided_slice %99 {offsets = [0, 0], sizes = [2, 32], strides = [1, 1]} : vector<2x96xf32> to vector<2x32xf32>
    %102 = arith.addf %100, %101 : vector<2x32xf32>
    %103 = arith.negf %102 : vector<2x32xf32>
    %104 = math.exp %103 : vector<2x32xf32>
    %cst_48 = arith.constant 1.000000e+00 : f32
    %105 = vector.broadcast %cst_48 : f32 to vector<2x32xf32>
    %106 = arith.addf %105, %104 : vector<2x32xf32>
    %107 = arith.divf %105, %106 : vector<2x32xf32>
    %108 = vector.extract_strided_slice %93 {offsets = [0, 32], sizes = [2, 32], strides = [1, 1]} : vector<2x96xf32> to vector<2x32xf32>
    %109 = vector.extract_strided_slice %99 {offsets = [0, 32], sizes = [2, 32], strides = [1, 1]} : vector<2x96xf32> to vector<2x32xf32>
    %110 = arith.addf %108, %109 : vector<2x32xf32>
    %111 = arith.negf %110 : vector<2x32xf32>
    %112 = math.exp %111 : vector<2x32xf32>
    %cst_49 = arith.constant 1.000000e+00 : f32
    %113 = vector.broadcast %cst_49 : f32 to vector<2x32xf32>
    %114 = arith.addf %113, %112 : vector<2x32xf32>
    %115 = arith.divf %113, %114 : vector<2x32xf32>
    %116 = vector.extract_strided_slice %93 {offsets = [0, 64], sizes = [2, 32], strides = [1, 1]} : vector<2x96xf32> to vector<2x32xf32>
    %117 = vector.extract_strided_slice %99 {offsets = [0, 64], sizes = [2, 32], strides = [1, 1]} : vector<2x96xf32> to vector<2x32xf32>
    %118 = arith.mulf %107, %117 : vector<2x32xf32>
    %119 = arith.addf %116, %118 : vector<2x32xf32>
    %120 = math.tanh %119 : vector<2x32xf32>
    %cst_50 = arith.constant 1.000000e+00 : f32
    %121 = vector.broadcast %cst_50 : f32 to vector<2x32xf32>
    %122 = arith.subf %121, %115 : vector<2x32xf32>
    %123 = arith.mulf %122, %120 : vector<2x32xf32>
    %124 = arith.mulf %115, %89 : vector<2x32xf32>
    %125 = arith.addf %123, %124 : vector<2x32xf32>
    %c3_i32 = arith.constant 3 : i32
    %126 = arith.index_cast %c3_i32 : i32 to index
    %c0_51 = arith.constant 0 : index
    %c0_52 = arith.constant 0 : index
    %127 = vector.load %arg16[%126, %c0_51, %c0_52] : memref<8x2x96xbf16, #tpu.memory_space<vmem>>, vector<1x2x96xbf16>
    %128 = vector.shape_cast %127 : vector<1x2x96xbf16> to vector<2x96xbf16>
    %129 = arith.extf %128 : vector<2x96xbf16> to vector<2x96xf32>
    %130 = arith.truncf %125 : vector<2x32xf32> to vector<2x32xbf16>
    %c0_53 = arith.constant 0 : index
    %c0_54 = arith.constant 0 : index
    %131 = vector.load %arg4[%c0_53, %c0_54] : memref<32x96xbf16, #tpu.memory_space<vmem>>, vector<32x96xbf16>
    %cst_55 = arith.constant dense<0.000000e+00> : vector<2x96xf32>
    %132 = tpu.matmul %130, %131, %cst_55 {dimension_numbers = #tpu.dot_dimension_numbers<[1], [0], [0], [1], [0, 0, 1, 1], [], []>} : vector<2x32xbf16>, vector<32x96xbf16>, vector<2x96xf32> -> vector<2x96xf32>
    %c0_56 = arith.constant 0 : index
    %c0_57 = arith.constant 0 : index
    %133 = vector.load %arg6[%c0_56, %c0_57] : memref<1x96xf32, #tpu.memory_space<vmem>>, vector<1x96xf32>
    %134 = vector.broadcast %133 : vector<1x96xf32> to vector<2x96xf32>
    %135 = arith.addf %132, %134 : vector<2x96xf32>
    %136 = vector.extract_strided_slice %129 {offsets = [0, 0], sizes = [2, 32], strides = [1, 1]} : vector<2x96xf32> to vector<2x32xf32>
    %137 = vector.extract_strided_slice %135 {offsets = [0, 0], sizes = [2, 32], strides = [1, 1]} : vector<2x96xf32> to vector<2x32xf32>
    %138 = arith.addf %136, %137 : vector<2x32xf32>
    %139 = arith.negf %138 : vector<2x32xf32>
    %140 = math.exp %139 : vector<2x32xf32>
    %cst_58 = arith.constant 1.000000e+00 : f32
    %141 = vector.broadcast %cst_58 : f32 to vector<2x32xf32>
    %142 = arith.addf %141, %140 : vector<2x32xf32>
    %143 = arith.divf %141, %142 : vector<2x32xf32>
    %144 = vector.extract_strided_slice %129 {offsets = [0, 32], sizes = [2, 32], strides = [1, 1]} : vector<2x96xf32> to vector<2x32xf32>
    %145 = vector.extract_strided_slice %135 {offsets = [0, 32], sizes = [2, 32], strides = [1, 1]} : vector<2x96xf32> to vector<2x32xf32>
    %146 = arith.addf %144, %145 : vector<2x32xf32>
    %147 = arith.negf %146 : vector<2x32xf32>
    %148 = math.exp %147 : vector<2x32xf32>
    %cst_59 = arith.constant 1.000000e+00 : f32
    %149 = vector.broadcast %cst_59 : f32 to vector<2x32xf32>
    %150 = arith.addf %149, %148 : vector<2x32xf32>
    %151 = arith.divf %149, %150 : vector<2x32xf32>
    %152 = vector.extract_strided_slice %129 {offsets = [0, 64], sizes = [2, 32], strides = [1, 1]} : vector<2x96xf32> to vector<2x32xf32>
    %153 = vector.extract_strided_slice %135 {offsets = [0, 64], sizes = [2, 32], strides = [1, 1]} : vector<2x96xf32> to vector<2x32xf32>
    %154 = arith.mulf %143, %153 : vector<2x32xf32>
    %155 = arith.addf %152, %154 : vector<2x32xf32>
    %156 = math.tanh %155 : vector<2x32xf32>
    %cst_60 = arith.constant 1.000000e+00 : f32
    %157 = vector.broadcast %cst_60 : f32 to vector<2x32xf32>
    %158 = arith.subf %157, %151 : vector<2x32xf32>
    %159 = arith.mulf %158, %156 : vector<2x32xf32>
    %160 = arith.mulf %151, %125 : vector<2x32xf32>
    %161 = arith.addf %159, %160 : vector<2x32xf32>
    %c4_i32 = arith.constant 4 : i32
    %162 = arith.index_cast %c4_i32 : i32 to index
    %c0_61 = arith.constant 0 : index
    %c0_62 = arith.constant 0 : index
    %163 = vector.load %arg16[%162, %c0_61, %c0_62] : memref<8x2x96xbf16, #tpu.memory_space<vmem>>, vector<1x2x96xbf16>
    %164 = vector.shape_cast %163 : vector<1x2x96xbf16> to vector<2x96xbf16>
    %165 = arith.extf %164 : vector<2x96xbf16> to vector<2x96xf32>
    %166 = arith.truncf %161 : vector<2x32xf32> to vector<2x32xbf16>
    %c0_63 = arith.constant 0 : index
    %c0_64 = arith.constant 0 : index
    %167 = vector.load %arg4[%c0_63, %c0_64] : memref<32x96xbf16, #tpu.memory_space<vmem>>, vector<32x96xbf16>
    %cst_65 = arith.constant dense<0.000000e+00> : vector<2x96xf32>
    %168 = tpu.matmul %166, %167, %cst_65 {dimension_numbers = #tpu.dot_dimension_numbers<[1], [0], [0], [1], [0, 0, 1, 1], [], []>} : vector<2x32xbf16>, vector<32x96xbf16>, vector<2x96xf32> -> vector<2x96xf32>
    %c0_66 = arith.constant 0 : index
    %c0_67 = arith.constant 0 : index
    %169 = vector.load %arg6[%c0_66, %c0_67] : memref<1x96xf32, #tpu.memory_space<vmem>>, vector<1x96xf32>
    %170 = vector.broadcast %169 : vector<1x96xf32> to vector<2x96xf32>
    %171 = arith.addf %168, %170 : vector<2x96xf32>
    %172 = vector.extract_strided_slice %165 {offsets = [0, 0], sizes = [2, 32], strides = [1, 1]} : vector<2x96xf32> to vector<2x32xf32>
    %173 = vector.extract_strided_slice %171 {offsets = [0, 0], sizes = [2, 32], strides = [1, 1]} : vector<2x96xf32> to vector<2x32xf32>
    %174 = arith.addf %172, %173 : vector<2x32xf32>
    %175 = arith.negf %174 : vector<2x32xf32>
    %176 = math.exp %175 : vector<2x32xf32>
    %cst_68 = arith.constant 1.000000e+00 : f32
    %177 = vector.broadcast %cst_68 : f32 to vector<2x32xf32>
    %178 = arith.addf %177, %176 : vector<2x32xf32>
    %179 = arith.divf %177, %178 : vector<2x32xf32>
    %180 = vector.extract_strided_slice %165 {offsets = [0, 32], sizes = [2, 32], strides = [1, 1]} : vector<2x96xf32> to vector<2x32xf32>
    %181 = vector.extract_strided_slice %171 {offsets = [0, 32], sizes = [2, 32], strides = [1, 1]} : vector<2x96xf32> to vector<2x32xf32>
    %182 = arith.addf %180, %181 : vector<2x32xf32>
    %183 = arith.negf %182 : vector<2x32xf32>
    %184 = math.exp %183 : vector<2x32xf32>
    %cst_69 = arith.constant 1.000000e+00 : f32
    %185 = vector.broadcast %cst_69 : f32 to vector<2x32xf32>
    %186 = arith.addf %185, %184 : vector<2x32xf32>
    %187 = arith.divf %185, %186 : vector<2x32xf32>
    %188 = vector.extract_strided_slice %165 {offsets = [0, 64], sizes = [2, 32], strides = [1, 1]} : vector<2x96xf32> to vector<2x32xf32>
    %189 = vector.extract_strided_slice %171 {offsets = [0, 64], sizes = [2, 32], strides = [1, 1]} : vector<2x96xf32> to vector<2x32xf32>
    %190 = arith.mulf %179, %189 : vector<2x32xf32>
    %191 = arith.addf %188, %190 : vector<2x32xf32>
    %192 = math.tanh %191 : vector<2x32xf32>
    %cst_70 = arith.constant 1.000000e+00 : f32
    %193 = vector.broadcast %cst_70 : f32 to vector<2x32xf32>
    %194 = arith.subf %193, %187 : vector<2x32xf32>
    %195 = arith.mulf %194, %192 : vector<2x32xf32>
    %196 = arith.mulf %187, %161 : vector<2x32xf32>
    %197 = arith.addf %195, %196 : vector<2x32xf32>
    %c5_i32 = arith.constant 5 : i32
    %198 = arith.index_cast %c5_i32 : i32 to index
    %c0_71 = arith.constant 0 : index
    %c0_72 = arith.constant 0 : index
    %199 = vector.load %arg16[%198, %c0_71, %c0_72] : memref<8x2x96xbf16, #tpu.memory_space<vmem>>, vector<1x2x96xbf16>
    %200 = vector.shape_cast %199 : vector<1x2x96xbf16> to vector<2x96xbf16>
    %201 = arith.extf %200 : vector<2x96xbf16> to vector<2x96xf32>
    %202 = arith.truncf %197 : vector<2x32xf32> to vector<2x32xbf16>
    %c0_73 = arith.constant 0 : index
    %c0_74 = arith.constant 0 : index
    %203 = vector.load %arg4[%c0_73, %c0_74] : memref<32x96xbf16, #tpu.memory_space<vmem>>, vector<32x96xbf16>
    %cst_75 = arith.constant dense<0.000000e+00> : vector<2x96xf32>
    %204 = tpu.matmul %202, %203, %cst_75 {dimension_numbers = #tpu.dot_dimension_numbers<[1], [0], [0], [1], [0, 0, 1, 1], [], []>} : vector<2x32xbf16>, vector<32x96xbf16>, vector<2x96xf32> -> vector<2x96xf32>
    %c0_76 = arith.constant 0 : index
    %c0_77 = arith.constant 0 : index
    %205 = vector.load %arg6[%c0_76, %c0_77] : memref<1x96xf32, #tpu.memory_space<vmem>>, vector<1x96xf32>
    %206 = vector.broadcast %205 : vector<1x96xf32> to vector<2x96xf32>
    %207 = arith.addf %204, %206 : vector<2x96xf32>
    %208 = vector.extract_strided_slice %201 {offsets = [0, 0], sizes = [2, 32], strides = [1, 1]} : vector<2x96xf32> to vector<2x32xf32>
    %209 = vector.extract_strided_slice %207 {offsets = [0, 0], sizes = [2, 32], strides = [1, 1]} : vector<2x96xf32> to vector<2x32xf32>
    %210 = arith.addf %208, %209 : vector<2x32xf32>
    %211 = arith.negf %210 : vector<2x32xf32>
    %212 = math.exp %211 : vector<2x32xf32>
    %cst_78 = arith.constant 1.000000e+00 : f32
    %213 = vector.broadcast %cst_78 : f32 to vector<2x32xf32>
    %214 = arith.addf %213, %212 : vector<2x32xf32>
    %215 = arith.divf %213, %214 : vector<2x32xf32>
    %216 = vector.extract_strided_slice %201 {offsets = [0, 32], sizes = [2, 32], strides = [1, 1]} : vector<2x96xf32> to vector<2x32xf32>
    %217 = vector.extract_strided_slice %207 {offsets = [0, 32], sizes = [2, 32], strides = [1, 1]} : vector<2x96xf32> to vector<2x32xf32>
    %218 = arith.addf %216, %217 : vector<2x32xf32>
    %219 = arith.negf %218 : vector<2x32xf32>
    %220 = math.exp %219 : vector<2x32xf32>
    %cst_79 = arith.constant 1.000000e+00 : f32
    %221 = vector.broadcast %cst_79 : f32 to vector<2x32xf32>
    %222 = arith.addf %221, %220 : vector<2x32xf32>
    %223 = arith.divf %221, %222 : vector<2x32xf32>
    %224 = vector.extract_strided_slice %201 {offsets = [0, 64], sizes = [2, 32], strides = [1, 1]} : vector<2x96xf32> to vector<2x32xf32>
    %225 = vector.extract_strided_slice %207 {offsets = [0, 64], sizes = [2, 32], strides = [1, 1]} : vector<2x96xf32> to vector<2x32xf32>
    %226 = arith.mulf %215, %225 : vector<2x32xf32>
    %227 = arith.addf %224, %226 : vector<2x32xf32>
    %228 = math.tanh %227 : vector<2x32xf32>
    %cst_80 = arith.constant 1.000000e+00 : f32
    %229 = vector.broadcast %cst_80 : f32 to vector<2x32xf32>
    %230 = arith.subf %229, %223 : vector<2x32xf32>
    %231 = arith.mulf %230, %228 : vector<2x32xf32>
    %232 = arith.mulf %223, %197 : vector<2x32xf32>
    %233 = arith.addf %231, %232 : vector<2x32xf32>
    %c6_i32 = arith.constant 6 : i32
    %234 = arith.index_cast %c6_i32 : i32 to index
    %c0_81 = arith.constant 0 : index
    %c0_82 = arith.constant 0 : index
    %235 = vector.load %arg16[%234, %c0_81, %c0_82] : memref<8x2x96xbf16, #tpu.memory_space<vmem>>, vector<1x2x96xbf16>
    %236 = vector.shape_cast %235 : vector<1x2x96xbf16> to vector<2x96xbf16>
    %237 = arith.extf %236 : vector<2x96xbf16> to vector<2x96xf32>
    %238 = arith.truncf %233 : vector<2x32xf32> to vector<2x32xbf16>
    %c0_83 = arith.constant 0 : index
    %c0_84 = arith.constant 0 : index
    %239 = vector.load %arg4[%c0_83, %c0_84] : memref<32x96xbf16, #tpu.memory_space<vmem>>, vector<32x96xbf16>
    %cst_85 = arith.constant dense<0.000000e+00> : vector<2x96xf32>
    %240 = tpu.matmul %238, %239, %cst_85 {dimension_numbers = #tpu.dot_dimension_numbers<[1], [0], [0], [1], [0, 0, 1, 1], [], []>} : vector<2x32xbf16>, vector<32x96xbf16>, vector<2x96xf32> -> vector<2x96xf32>
    %c0_86 = arith.constant 0 : index
    %c0_87 = arith.constant 0 : index
    %241 = vector.load %arg6[%c0_86, %c0_87] : memref<1x96xf32, #tpu.memory_space<vmem>>, vector<1x96xf32>
    %242 = vector.broadcast %241 : vector<1x96xf32> to vector<2x96xf32>
    %243 = arith.addf %240, %242 : vector<2x96xf32>
    %244 = vector.extract_strided_slice %237 {offsets = [0, 0], sizes = [2, 32], strides = [1, 1]} : vector<2x96xf32> to vector<2x32xf32>
    %245 = vector.extract_strided_slice %243 {offsets = [0, 0], sizes = [2, 32], strides = [1, 1]} : vector<2x96xf32> to vector<2x32xf32>
    %246 = arith.addf %244, %245 : vector<2x32xf32>
    %247 = arith.negf %246 : vector<2x32xf32>
    %248 = math.exp %247 : vector<2x32xf32>
    %cst_88 = arith.constant 1.000000e+00 : f32
    %249 = vector.broadcast %cst_88 : f32 to vector<2x32xf32>
    %250 = arith.addf %249, %248 : vector<2x32xf32>
    %251 = arith.divf %249, %250 : vector<2x32xf32>
    %252 = vector.extract_strided_slice %237 {offsets = [0, 32], sizes = [2, 32], strides = [1, 1]} : vector<2x96xf32> to vector<2x32xf32>
    %253 = vector.extract_strided_slice %243 {offsets = [0, 32], sizes = [2, 32], strides = [1, 1]} : vector<2x96xf32> to vector<2x32xf32>
    %254 = arith.addf %252, %253 : vector<2x32xf32>
    %255 = arith.negf %254 : vector<2x32xf32>
    %256 = math.exp %255 : vector<2x32xf32>
    %cst_89 = arith.constant 1.000000e+00 : f32
    %257 = vector.broadcast %cst_89 : f32 to vector<2x32xf32>
    %258 = arith.addf %257, %256 : vector<2x32xf32>
    %259 = arith.divf %257, %258 : vector<2x32xf32>
    %260 = vector.extract_strided_slice %237 {offsets = [0, 64], sizes = [2, 32], strides = [1, 1]} : vector<2x96xf32> to vector<2x32xf32>
    %261 = vector.extract_strided_slice %243 {offsets = [0, 64], sizes = [2, 32], strides = [1, 1]} : vector<2x96xf32> to vector<2x32xf32>
    %262 = arith.mulf %251, %261 : vector<2x32xf32>
    %263 = arith.addf %260, %262 : vector<2x32xf32>
    %264 = math.tanh %263 : vector<2x32xf32>
    %cst_90 = arith.constant 1.000000e+00 : f32
    %265 = vector.broadcast %cst_90 : f32 to vector<2x32xf32>
    %266 = arith.subf %265, %259 : vector<2x32xf32>
    %267 = arith.mulf %266, %264 : vector<2x32xf32>
    %268 = arith.mulf %259, %233 : vector<2x32xf32>
    %269 = arith.addf %267, %268 : vector<2x32xf32>
    %c7_i32 = arith.constant 7 : i32
    %270 = arith.index_cast %c7_i32 : i32 to index
    %c0_91 = arith.constant 0 : index
    %c0_92 = arith.constant 0 : index
    %271 = vector.load %arg16[%270, %c0_91, %c0_92] : memref<8x2x96xbf16, #tpu.memory_space<vmem>>, vector<1x2x96xbf16>
    %272 = vector.shape_cast %271 : vector<1x2x96xbf16> to vector<2x96xbf16>
    %273 = arith.extf %272 : vector<2x96xbf16> to vector<2x96xf32>
    %274 = arith.truncf %269 : vector<2x32xf32> to vector<2x32xbf16>
    %c0_93 = arith.constant 0 : index
    %c0_94 = arith.constant 0 : index
    %275 = vector.load %arg4[%c0_93, %c0_94] : memref<32x96xbf16, #tpu.memory_space<vmem>>, vector<32x96xbf16>
    %cst_95 = arith.constant dense<0.000000e+00> : vector<2x96xf32>
    %276 = tpu.matmul %274, %275, %cst_95 {dimension_numbers = #tpu.dot_dimension_numbers<[1], [0], [0], [1], [0, 0, 1, 1], [], []>} : vector<2x32xbf16>, vector<32x96xbf16>, vector<2x96xf32> -> vector<2x96xf32>
    %c0_96 = arith.constant 0 : index
    %c0_97 = arith.constant 0 : index
    %277 = vector.load %arg6[%c0_96, %c0_97] : memref<1x96xf32, #tpu.memory_space<vmem>>, vector<1x96xf32>
    %278 = vector.broadcast %277 : vector<1x96xf32> to vector<2x96xf32>
    %279 = arith.addf %276, %278 : vector<2x96xf32>
    %280 = vector.extract_strided_slice %273 {offsets = [0, 0], sizes = [2, 32], strides = [1, 1]} : vector<2x96xf32> to vector<2x32xf32>
    %281 = vector.extract_strided_slice %279 {offsets = [0, 0], sizes = [2, 32], strides = [1, 1]} : vector<2x96xf32> to vector<2x32xf32>
    %282 = arith.addf %280, %281 : vector<2x32xf32>
    %283 = arith.negf %282 : vector<2x32xf32>
    %284 = math.exp %283 : vector<2x32xf32>
    %cst_98 = arith.constant 1.000000e+00 : f32
    %285 = vector.broadcast %cst_98 : f32 to vector<2x32xf32>
    %286 = arith.addf %285, %284 : vector<2x32xf32>
    %287 = arith.divf %285, %286 : vector<2x32xf32>
    %288 = vector.extract_strided_slice %273 {offsets = [0, 32], sizes = [2, 32], strides = [1, 1]} : vector<2x96xf32> to vector<2x32xf32>
    %289 = vector.extract_strided_slice %279 {offsets = [0, 32], sizes = [2, 32], strides = [1, 1]} : vector<2x96xf32> to vector<2x32xf32>
    %290 = arith.addf %288, %289 : vector<2x32xf32>
    %291 = arith.negf %290 : vector<2x32xf32>
    %292 = math.exp %291 : vector<2x32xf32>
    %cst_99 = arith.constant 1.000000e+00 : f32
    %293 = vector.broadcast %cst_99 : f32 to vector<2x32xf32>
    %294 = arith.addf %293, %292 : vector<2x32xf32>
    %295 = arith.divf %293, %294 : vector<2x32xf32>
    %296 = vector.extract_strided_slice %273 {offsets = [0, 64], sizes = [2, 32], strides = [1, 1]} : vector<2x96xf32> to vector<2x32xf32>
    %297 = vector.extract_strided_slice %279 {offsets = [0, 64], sizes = [2, 32], strides = [1, 1]} : vector<2x96xf32> to vector<2x32xf32>
    %298 = arith.mulf %287, %297 : vector<2x32xf32>
    %299 = arith.addf %296, %298 : vector<2x32xf32>
    %300 = math.tanh %299 : vector<2x32xf32>
    %cst_100 = arith.constant 1.000000e+00 : f32
    %301 = vector.broadcast %cst_100 : f32 to vector<2x32xf32>
    %302 = arith.subf %301, %295 : vector<2x32xf32>
    %303 = arith.mulf %302, %300 : vector<2x32xf32>
    %304 = arith.mulf %295, %269 : vector<2x32xf32>
    %305 = arith.addf %303, %304 : vector<2x32xf32>
    %c8_i32 = arith.constant 8 : i32
    %306 = arith.truncf %305 : vector<2x32xf32> to vector<2x32xbf16>
    %c0_101 = arith.constant 0 : index
    %c0_102 = arith.constant 0 : index
    %307 = vector.load %arg8[%c0_101, %c0_102] : memref<32x32xbf16, #tpu.memory_space<vmem>>, vector<32x32xbf16>
    %cst_103 = arith.constant dense<0.000000e+00> : vector<2x32xf32>
    %308 = tpu.matmul %306, %307, %cst_103 {dimension_numbers = #tpu.dot_dimension_numbers<[1], [0], [0], [1], [0, 0, 1, 1], [], []>} : vector<2x32xbf16>, vector<32x32xbf16>, vector<2x32xf32> -> vector<2x32xf32>
    %c0_104 = arith.constant 0 : index
    %c0_105 = arith.constant 0 : index
    %c0_106 = arith.constant 0 : index
    %309 = vector.load %arg17[%c0_104, %c0_105, %c0_106] : memref<2x8x32xf32, #tpu.memory_space<vmem>>, vector<2x8x32xf32>
    %310 = vector.shape_cast %308 : vector<2x32xf32> to vector<2x1x32xf32>
    %311 = vector.broadcast %310 : vector<2x1x32xf32> to vector<2x8x32xf32>
    %312 = arith.addf %309, %311 : vector<2x8x32xf32>
    %cst_107 = arith.constant 0.000000e+00 : f32
    %313 = vector.broadcast %cst_107 : f32 to vector<2x8x32xf32>
    %314 = arith.maximumf %312, %313 : vector<2x8x32xf32>
    %c0_108 = arith.constant 0 : index
    %c0_109 = arith.constant 0 : index
    %315 = vector.load %arg10[%c0_108, %c0_109] : memref<1x32xf32, #tpu.memory_space<vmem>>, vector<1x32xf32>
    %316 = vector.shape_cast %315 : vector<1x32xf32> to vector<1x1x32xf32>
    %317 = vector.broadcast %316 : vector<1x1x32xf32> to vector<2x8x32xf32>
    %318 = arith.mulf %314, %317 : vector<2x8x32xf32>
    %cst_110 = arith.constant dense<0.000000e+00> : vector<2x8xf32>
    %319 = vector.multi_reduction <add>, %318, %cst_110 [2] : vector<2x8x32xf32> to vector<2x8xf32>
    %cst_111 = arith.constant dense<0xFF800000> : vector<2xf32>
    %320 = vector.multi_reduction <maximumf>, %319, %cst_111 [1] : vector<2x8xf32> to vector<2xf32>
    %321 = vector.shape_cast %320 : vector<2xf32> to vector<2x1xf32>
    %322 = vector.broadcast %321 : vector<2x1xf32> to vector<2x8xf32>
    %323 = arith.subf %319, %322 : vector<2x8xf32>
    %324 = math.exp %323 : vector<2x8xf32>
    %cst_112 = arith.constant dense<0.000000e+00> : vector<2xf32>
    %325 = vector.multi_reduction <add>, %324, %cst_112 [1] : vector<2x8xf32> to vector<2xf32>
    %326 = vector.shape_cast %325 : vector<2xf32> to vector<2x1xf32>
    %327 = tpu.reciprocal %326 {approx = true} : vector<2x1xf32> -> vector<2x1xf32>
    %328 = vector.broadcast %327 : vector<2x1xf32> to vector<2x8xf32>
    %329 = arith.mulf %324, %328 : vector<2x8xf32>
    %330 = vector.shape_cast %329 : vector<2x8xf32> to vector<2x8x1xf32>
    %c0_113 = arith.constant 0 : index
    %c0_114 = arith.constant 0 : index
    %c0_115 = arith.constant 0 : index
    %331 = vector.load %arg2[%c0_113, %c0_114, %c0_115] : memref<2x8x32xbf16, #tpu.memory_space<vmem>>, vector<2x8x32xbf16>
    %332 = arith.extf %331 : vector<2x8x32xbf16> to vector<2x8x32xf32>
    %333 = vector.broadcast %330 : vector<2x8x1xf32> to vector<2x8x32xf32>
    %334 = arith.mulf %333, %332 : vector<2x8x32xf32>
    %cst_116 = arith.constant dense<0.000000e+00> : vector<2x32xf32>
    %335 = vector.multi_reduction <add>, %334, %cst_116 [1] : vector<2x8x32xf32> to vector<2x32xf32>
    %336 = arith.truncf %305 : vector<2x32xf32> to vector<2x32xbf16>
    %c0_117 = arith.constant 0 : index
    %c0_118 = arith.constant 0 : index
    %337 = vector.load %arg11[%c0_117, %c0_118] : memref<32x32xbf16, #tpu.memory_space<vmem>>, vector<32x32xbf16>
    %cst_119 = arith.constant dense<0.000000e+00> : vector<2x32xf32>
    %338 = tpu.matmul %336, %337, %cst_119 {dimension_numbers = #tpu.dot_dimension_numbers<[1], [0], [0], [1], [0, 0, 1, 1], [], []>} : vector<2x32xbf16>, vector<32x32xbf16>, vector<2x32xf32> -> vector<2x32xf32>
    %c0_120 = arith.constant 0 : index
    %c0_121 = arith.constant 0 : index
    %339 = vector.load %arg12[%c0_120, %c0_121] : memref<1x32xf32, #tpu.memory_space<vmem>>, vector<1x32xf32>
    %340 = vector.broadcast %339 : vector<1x32xf32> to vector<2x32xf32>
    %341 = arith.addf %338, %340 : vector<2x32xf32>
    %cst_122 = arith.constant 0.000000e+00 : f32
    %342 = vector.broadcast %cst_122 : f32 to vector<2x32xf32>
    %343 = arith.maximumf %341, %342 : vector<2x32xf32>
    %344 = arith.truncf %335 : vector<2x32xf32> to vector<2x32xbf16>
    %c0_123 = arith.constant 0 : index
    %c0_124 = arith.constant 0 : index
    %345 = vector.load %arg13[%c0_123, %c0_124] : memref<32x32xbf16, #tpu.memory_space<vmem>>, vector<32x32xbf16>
    %cst_125 = arith.constant dense<0.000000e+00> : vector<2x32xf32>
    %346 = tpu.matmul %344, %345, %cst_125 {dimension_numbers = #tpu.dot_dimension_numbers<[1], [0], [0], [1], [0, 0, 1, 1], [], []>} : vector<2x32xbf16>, vector<32x32xbf16>, vector<2x32xf32> -> vector<2x32xf32>
    %c0_126 = arith.constant 0 : index
    %c0_127 = arith.constant 0 : index
    %347 = vector.load %arg14[%c0_126, %c0_127] : memref<1x32xf32, #tpu.memory_space<vmem>>, vector<1x32xf32>
    %348 = vector.broadcast %347 : vector<1x32xf32> to vector<2x32xf32>
    %349 = arith.addf %346, %348 : vector<2x32xf32>
    %cst_128 = arith.constant 0.000000e+00 : f32
    %350 = vector.broadcast %cst_128 : f32 to vector<2x32xf32>
    %351 = arith.maximumf %349, %350 : vector<2x32xf32>
    %352 = arith.mulf %343, %351 : vector<2x32xf32>
    %c0_129 = arith.constant 0 : index
    %c0_130 = arith.constant 0 : index
    %353 = vector.load %arg15[%c0_129, %c0_130] : memref<2x32xf32, #tpu.memory_space<vmem>>, vector<2x32xf32>
    tpu.vector_store %arg15[%c0_129, %c0_130], %352 {strides = array<i32>} : memref<2x32xf32, #tpu.memory_space<vmem>>, vector<2x32xf32>,
    return
  }
  func.func @transform_0(%arg0: i32) -> (i32, i32, i32) {
    %c0_i32 = arith.constant 0 : i32
    %c0_i32_0 = arith.constant 0 : i32
    %c0_i32_1 = arith.constant 0 : i32
    return %c0_i32, %arg0, %c0_i32_0 : i32, i32, i32
  }
  func.func @transform_1(%arg0: i32) -> (i32, i32, i32) {
    %c0_i32 = arith.constant 0 : i32
    %c0_i32_0 = arith.constant 0 : i32
    %c0_i32_1 = arith.constant 0 : i32
    return %arg0, %c0_i32, %c0_i32_0 : i32, i32, i32
  }
  func.func @transform_2(%arg0: i32) -> (i32, i32) {
    %c0_i32 = arith.constant 0 : i32
    %c0_i32_0 = arith.constant 0 : i32
    %c0_i32_1 = arith.constant 0 : i32
    return %c0_i32, %c0_i32_0 : i32, i32
  }
  func.func @transform_3(%arg0: i32) -> (i32, i32) {
    %c0_i32 = arith.constant 0 : i32
    %c0_i32_0 = arith.constant 0 : i32
    %c0_i32_1 = arith.constant 0 : i32
    return %c0_i32, %c0_i32_0 : i32, i32
  }
  func.func @transform_4(%arg0: i32) -> (i32, i32) {
    %c0_i32 = arith.constant 0 : i32
    %c0_i32_0 = arith.constant 0 : i32
    %c0_i32_1 = arith.constant 0 : i32
    return %c0_i32, %c0_i32_0 : i32, i32
  }
  func.func @transform_5(%arg0: i32) -> (i32, i32) {
    %c0_i32 = arith.constant 0 : i32
    %c0_i32_0 = arith.constant 0 : i32
    %c0_i32_1 = arith.constant 0 : i32
    return %c0_i32, %c0_i32_0 : i32, i32
  }
  func.func @transform_6(%arg0: i32) -> (i32, i32) {
    %c0_i32 = arith.constant 0 : i32
    %c0_i32_0 = arith.constant 0 : i32
    %c0_i32_1 = arith.constant 0 : i32
    return %c0_i32, %c0_i32_0 : i32, i32
  }
  func.func @transform_7(%arg0: i32) -> (i32, i32) {
    %c0_i32 = arith.constant 0 : i32
    %c0_i32_0 = arith.constant 0 : i32
    %c0_i32_1 = arith.constant 0 : i32
    return %c0_i32, %c0_i32_0 : i32, i32
  }
  func.func @transform_8(%arg0: i32) -> (i32, i32) {
    %c0_i32 = arith.constant 0 : i32
    %c0_i32_0 = arith.constant 0 : i32
    %c0_i32_1 = arith.constant 0 : i32
    return %c0_i32, %c0_i32_0 : i32, i32
  }
  func.func @transform_9(%arg0: i32) -> (i32, i32) {
    %c0_i32 = arith.constant 0 : i32
    %c0_i32_0 = arith.constant 0 : i32
    %c0_i32_1 = arith.constant 0 : i32
    return %c0_i32, %c0_i32_0 : i32, i32
  }
  func.func @transform_10(%arg0: i32) -> (i32, i32) {
    %c0_i32 = arith.constant 0 : i32
    %c0_i32_0 = arith.constant 0 : i32
    %c0_i32_1 = arith.constant 0 : i32
    return %c0_i32, %c0_i32_0 : i32, i32
  }
  func.func @transform_11(%arg0: i32) -> (i32, i32) {
    %c0_i32 = arith.constant 0 : i32
    %c0_i32_0 = arith.constant 0 : i32
    %c0_i32_1 = arith.constant 0 : i32
    return %c0_i32, %c0_i32_0 : i32, i32
  }
  func.func @transform_12(%arg0: i32) -> (i32, i32) {
    %c0_i32 = arith.constant 0 : i32
    %c0_i32_0 = arith.constant 0 : i32
    %c0_i32_1 = arith.constant 0 : i32
    return %c0_i32, %c0_i32_0 : i32, i32
  }
  func.func @transform_13(%arg0: i32) -> (i32, i32) {
    %c0_i32 = arith.constant 0 : i32
    %c0_i32_0 = arith.constant 0 : i32
    %c0_i32_1 = arith.constant 0 : i32
    return %c0_i32, %c0_i32_0 : i32, i32
  }
  func.func @transform_14(%arg0: i32) -> (i32, i32) {
    %c0_i32 = arith.constant 0 : i32
    %c0_i32_0 = arith.constant 0 : i32
    return %arg0, %c0_i32 : i32, i32
  }
}

</mosaic_0001>

<llo_original>
// kernel: base_model_forward.1
$region0: #{base_model_forward.1}
  #allocation0 [shape = 'u32[]', space=smem, size = 0x4, offset = 0x4, fixed_abs, tag = 'smem constant byte address 0x4 - core index']
  #allocation1 [shape = 'u32[72,128]{1,0:T(1,128)}', space=vmem, size = 0x9000, scoped, tag = 'internal scratch']
  #allocation2 [shape = 'bf16[8,2,96]{2,1,0:T(2,128)(2,1)}', space=vmem, size = 0x1000, scoped, tag = 'scratch operand']
  #allocation3 [shape = 'f32[2,8,32]{2,1,0:T(8,128)}', space=vmem, size = 0x2000, scoped, tag = 'scratch operand']
  %s0 = inlined_call_operand.vmem [shape: bf16[8,2,32], index: 0, kind: input, shape index: {}]
  %s1 = inlined_call_operand.vmem [shape: bf16[2,8,32], index: 1, kind: input, shape index: {}]
  %s2 = inlined_call_operand.vmem [shape: bf16[32,96], index: 2, kind: input, shape index: {}]
  %s3 = inlined_call_operand.vmem [shape: bf16[32,96], index: 3, kind: input, shape index: {}]
  %s4 = inlined_call_operand.vmem [shape: f32[1,96], index: 4, kind: input, shape index: {}]
  %s5 = inlined_call_operand.vmem [shape: f32[1,96], index: 5, kind: input, shape index: {}]
  %s6 = inlined_call_operand.vmem [shape: bf16[32,32], index: 6, kind: input, shape index: {}]
  %s7 = inlined_call_operand.vmem [shape: bf16[32,32], index: 7, kind: input, shape index: {}]
  %s8 = inlined_call_operand.vmem [shape: f32[1,32], index: 8, kind: input, shape index: {}]
  %s9 = inlined_call_operand.vmem [shape: f32[1,32], index: 9, kind: input, shape index: {}]
  %s10 = inlined_call_operand.vmem [shape: bf16[32,32], index: 10, kind: input, shape index: {}]
  %s11 = inlined_call_operand.vmem [shape: f32[1,32], index: 11, kind: input, shape index: {}]
  %s12 = inlined_call_operand.vmem [shape: bf16[32,32], index: 12, kind: input, shape index: {}]
  %s13 = inlined_call_operand.vmem [shape: f32[1,32], index: 13, kind: input, shape index: {}]
  %s14 = inlined_call_operand.hbm [shape: f32[2,32], index: 14, kind: output, shape index: {}]
  %s15 = sld [smem:[#allocation0]]
  $region66: #{base_model_forward.1} parent=0
    _
  %s17 = ssub.s32 1, %s15
  %s18 = scalar_select 0, %s17, %s15
  $region1: #{base_model_forward.1} parent=0
    #allocation4 [shape = 'u8[1024]{0}', space=vmem, size = 0x400, scoped, tag = 'output window, operand 0, single buffered']
    #allocation5 [shape = 's32[1]{0}', space=sflag, size = 0x4, scoped, tag = 'scoped memory for base_model_forward.1']
    %19 = vsyncpa [#allocation5], 0
    // Predicated region
    $region2: #{base_model_forward.1} parent=1 // pred_check
      _
    $region3: #{base_model_forward.1} parent=1 // pred_check_branch
      %21 = sbr.rel (0) target = $region5
    $region4: #{base_model_forward.1} parent=1 // pred_region
      _
    $region5: #{base_model_forward.1} parent=1 // pred_fallthru
      _
    // Predicated region
    $region6: #{base_model_forward.1} parent=1 // pred_check
      _
    $region7: #{base_model_forward.1} parent=1 // pred_check_branch
      %23 = sbr.rel (0) target = $region9
    $region8: #{base_model_forward.1} parent=1 // pred_region
      _
    $region9: #{base_model_forward.1} parent=1 // pred_fallthru
      _
    // Predicated region
    $region10: #{base_model_forward.1} parent=1 // pred_check
      _
    $region11: #{base_model_forward.1} parent=1 // pred_check_branch
      %25 = sbr.rel (0) target = $region13
    $region12: #{base_model_forward.1} parent=1 // pred_region
      _
    $region13: #{base_model_forward.1} parent=1 // pred_fallthru
      _
    // Predicated region
    $region14: #{base_model_forward.1} parent=1 // pred_check
      _
    $region15: #{base_model_forward.1} parent=1 // pred_check_branch
      %27 = sbr.rel (0) target = $region17
    $region16: #{base_model_forward.1} parent=1 // pred_region
      _
    $region17: #{base_model_forward.1} parent=1 // pred_fallthru
      _
    // Predicated region
    $region18: #{base_model_forward.1} parent=1 // pred_check
      _
    $region19: #{base_model_forward.1} parent=1 // pred_check_branch
      %29 = sbr.rel (0) target = $region21
    $region20: #{base_model_forward.1} parent=1 // pred_region
      _
    $region21: #{base_model_forward.1} parent=1 // pred_fallthru
      _
    // Predicated region
    $region22: #{base_model_forward.1} parent=1 // pred_check
      _
    $region23: #{base_model_forward.1} parent=1 // pred_check_branch
      %31 = sbr.rel (0) target = $region25
    $region24: #{base_model_forward.1} parent=1 // pred_region
      _
    $region25: #{base_model_forward.1} parent=1 // pred_fallthru
      _
    // Predicated region
    $region26: #{base_model_forward.1} parent=1 // pred_check
      _
    $region27: #{base_model_forward.1} parent=1 // pred_check_branch
      %33 = sbr.rel (0) target = $region29
    $region28: #{base_model_forward.1} parent=1 // pred_region
      _
    $region29: #{base_model_forward.1} parent=1 // pred_fallthru
      _
    // Predicated region
    $region30: #{base_model_forward.1} parent=1 // pred_check
      _
    $region31: #{base_model_forward.1} parent=1 // pred_check_branch
      %35 = sbr.rel (0) target = $region33
    $region32: #{base_model_forward.1} parent=1 // pred_region
      _
    $region33: #{base_model_forward.1} parent=1 // pred_fallthru
      _
    // Predicated region
    $region34: #{base_model_forward.1} parent=1 // pred_check
      _
    $region35: #{base_model_forward.1} parent=1 // pred_check_branch
      %37 = sbr.rel (0) target = $region37
    $region36: #{base_model_forward.1} parent=1 // pred_region
      _
    $region37: #{base_model_forward.1} parent=1 // pred_fallthru
      _
    // Predicated region
    $region38: #{base_model_forward.1} parent=1 // pred_check
      _
    $region39: #{base_model_forward.1} parent=1 // pred_check_branch
      %39 = sbr.rel (0) target = $region41
    $region40: #{base_model_forward.1} parent=1 // pred_region
      _
    $region41: #{base_model_forward.1} parent=1 // pred_fallthru
      _
    // Predicated region
    $region42: #{base_model_forward.1} parent=1 // pred_check
      _
    $region43: #{base_model_forward.1} parent=1 // pred_check_branch
      %41 = sbr.rel (0) target = $region45
    $region44: #{base_model_forward.1} parent=1 // pred_region
      _
    $region45: #{base_model_forward.1} parent=1 // pred_fallthru
      _
    // Predicated region
    $region46: #{base_model_forward.1} parent=1 // pred_check
      _
    $region47: #{base_model_forward.1} parent=1 // pred_check_branch
      %43 = sbr.rel (0) target = $region49
    $region48: #{base_model_forward.1} parent=1 // pred_region
      _
    $region49: #{base_model_forward.1} parent=1 // pred_fallthru
      _
    // Predicated region
    $region50: #{base_model_forward.1} parent=1 // pred_check
      _
    $region51: #{base_model_forward.1} parent=1 // pred_check_branch
      %45 = sbr.rel (0) target = $region53
    $region52: #{base_model_forward.1} parent=1 // pred_region
      _
    $region53: #{base_model_forward.1} parent=1 // pred_fallthru
      _
    // Predicated region
    $region54: #{base_model_forward.1} parent=1 // pred_check
      _
    $region55: #{base_model_forward.1} parent=1 // pred_check_branch
      %47 = sbr.rel (0) target = $region57
    $region56: #{base_model_forward.1} parent=1 // pred_region
      _
    $region57: #{base_model_forward.1} parent=1 // pred_fallthru
      _
    %v49 = vld [vmem:[%s1] sm:$0xf]
    %v50 = vld [vmem:[%s1 + $0x4] sm:$0xf]
    %v51 = vld [vmem:[%s6] sm:$0xf]
    %v52 = vld [vmem:[%s6 + $0x4] sm:$0xf]
    %v53 = vld [vmem:[%s6 + $0x8] sm:$0xf]
    %v54 = vld [vmem:[%s6 + $0xc] sm:$0xf]
    %v55 = vld [vmem:[%s8] sm:$0x1]
    %v57 = vperm.slane %v55, 0
    %v61 = vunpack.c.l.b16 %v49
    %v62 = vunpack.c.l.b16 %v50
    %v63 = vpack.c.b16 %v62, %v61
    %v68 = vunpack.c.l.b16 %v51
    %v69 = vunpack.c.l.b16 %v52
    %v70 = vunpack.c.l.b16 %v53
    %v71 = vunpack.c.l.b16 %v54
    %v72 = vpack.c.b16 %v69, %v68
    %v73 = vpack.c.b16 %v71, %v70
    %vm76 = vcmask 261120
    %v78 = vsel %vm76, %v63, 0
    %80 = vmatpush.bf16.msra.mxu0 0
    %81 = vmatpush.bf16.msra.mxu0 0
    %82 = vmatpush.bf16.msra.mxu0 0
    %83 = vmatpush.bf16.msra.mxu0 0
    %84 = vmatpush.bf16.msra.mxu0 0
    %85 = vmatpush.bf16.msra.mxu0 0
    %86 = vmatpush.bf16.msra.mxu0 %v73
    %87 = vmatpush.bf16.msra.mxu0 %v72
    %88 = vmatmul.bf16.gmra.mxu0 %v78
    %v89 = vpop.f32.mrf.mxu0
    %v90 = vadd.f32 %v57, %v89
    %v91 = vpop.f32.mrf.mxu0
    %v92 = vadd.f32 %v57, %v91
    %93 = vdwg.mxu0
    %94 = vst.msk [vmem:[#allocation3] sm:$0xff] %vm76, %v90
    %95 = vst.msk [vmem:[#allocation3 + $0x8] sm:$0xff] %vm76, %v92
    %v96 = vld [vmem:[%s0] sm:$0x1]
    %v97 = vld [vmem:[%s0 + $0x1] sm:$0x1]
    %v98 = vld [vmem:[%s0 + $0x2] sm:$0x1]
    %v99 = vld [vmem:[%s0 + $0x3] sm:$0x1]
    %v100 = vld [vmem:[%s0 + $0x4] sm:$0x1]
    %v101 = vld [vmem:[%s0 + $0x5] sm:$0x1]
    %v102 = vld [vmem:[%s0 + $0x6] sm:$0x1]
    %v103 = vld [vmem:[%s0 + $0x7] sm:$0x1]
    %v104 = vld [vmem:[%s2] sm:$0xf]
    %v105 = vld [vmem:[%s2 + $0x4] sm:$0xf]
    %v106 = vld [vmem:[%s2 + $0x8] sm:$0xf]
    %v107 = vld [vmem:[%s2 + $0xc] sm:$0xf]
    %v108 = vld [vmem:[%s4] sm:$0x1]
    %v110 = vperm.slane %v108, 0
    %112 = vst [vmem:[#allocation1] ss:$9 sm:$0xff] %v96
    %s114 = scalar_lea.vmem [#allocation1], 1
    %115 = vst [vmem:[%s114] ss:$9 sm:$0xff] %v97
    %s117 = scalar_lea.vmem [#allocation1], 2
    %118 = vst [vmem:[%s117] ss:$9 sm:$0xff] %v98
    %s120 = scalar_lea.vmem [#allocation1], 3
    %121 = vst [vmem:[%s120] ss:$9 sm:$0xff] %v99
    %s123 = scalar_lea.vmem [#allocation1], 4
    %124 = vst [vmem:[%s123] ss:$9 sm:$0xff] %v100
    %s126 = scalar_lea.vmem [#allocation1], 5
    %127 = vst [vmem:[%s126] ss:$9 sm:$0xff] %v101
    %s129 = scalar_lea.vmem [#allocation1], 6
    %130 = vst [vmem:[%s129] ss:$9 sm:$0xff] %v102
    %s132 = scalar_lea.vmem [#allocation1], 7
    %133 = vst [vmem:[%s132] ss:$9 sm:$0xff] %v103
    %v134 = vld [vmem:[#allocation1] sm:$0xff]
    %v139 = vunpack.c.l.b16 %v104
    %v140 = vunpack.c.l.b16 %v105
    %v141 = vunpack.c.l.b16 %v106
    %v142 = vunpack.c.l.b16 %v107
    %v143 = vpack.c.b16 %v140, %v139
    %v144 = vpack.c.b16 %v142, %v141
    %147 = vst [vmem:[#allocation1] ss:$4 sm:$0xff] %v110
    %s148 = scalar_lea.vmem [#allocation1], 1
    %149 = vst [vmem:[%s148] ss:$4 sm:$0xff] %v110
    %s150 = scalar_lea.vmem [#allocation1], 2
    %151 = vst [vmem:[%s150] ss:$4 sm:$0xff] %v110
    %s152 = scalar_lea.vmem [#allocation1], 3
    %153 = vst [vmem:[%s152] ss:$4 sm:$0xff] %v110
    %s154 = scalar_lea.vmem [#allocation1], 32
    %155 = vst [vmem:[%s154] ss:$4 sm:$0xff] %v110
    %s156 = scalar_lea.vmem [#allocation1], 33
    %157 = vst [vmem:[%s156] ss:$4 sm:$0xff] %v110
    %s158 = scalar_lea.vmem [#allocation1], 34
    %159 = vst [vmem:[%s158] ss:$4 sm:$0xff] %v110
    %s160 = scalar_lea.vmem [#allocation1], 35
    %161 = vst [vmem:[%s160] ss:$4 sm:$0xff] %v110
    %v162 = vld.sshfl [vmem:[#allocation1] sm:$0xff pattern:$0x73625140]
    %v163 = vld.sshfl [vmem:[#allocation1 + $0x20] sm:$0xff pattern:$0x73625140]
    %v166 = vsel %vm76, %v134, 0
    %168 = vmatpush.bf16.msra.mxu0 0
    %169 = vmatpush.bf16.msra.mxu0 0
    %170 = vmatpush.bf16.msra.mxu0 0
    %171 = vmatpush.bf16.msra.mxu0 0
    %172 = vmatpush.bf16.msra.mxu0 0
    %173 = vmatpush.bf16.msra.mxu0 0
    %174 = vmatpush.bf16.msra.mxu0 %v144
    %175 = vmatpush.bf16.msra.mxu0 %v143
    %176 = vmatmul.bf16.gmra.mxu0 %v166
    %v177 = vpop.f32.mrf.mxu0
    %v178 = vadd.f32 %v162, %v177
    %v179 = vpop.f32.mrf.mxu0
    %v180 = vadd.f32 %v163, %v179
    %181 = vdwg.mxu0
    %v184 = vrot.slane %v178, 2
    %v185 = vrot.slane %v178, 4
    %v186 = vrot.slane %v178, 6
    %v187 = vrot.slane %v180, 2
    %v188 = vrot.slane %v180, 4
    %v189 = vrot.slane %v180, 6
    %v196 = vpack.c.bf16 %v178, %v178
    %v197 = vpack.c.bf16 %v184, %v184
    %v198 = vpack.c.bf16 %v185, %v185
    %v199 = vpack.c.bf16 %v186, %v186
    %v200 = vpack.c.bf16 %v180, %v180
    %v201 = vpack.c.bf16 %v187, %v187
    %v202 = vpack.c.bf16 %v188, %v188
    %v203 = vpack.c.bf16 %v189, %v189
    %vm204 = vcmask 778240
    %205 = vst.msk [vmem:[#allocation2] sm:$0x1] %vm204, %v196
    %206 = vst.msk [vmem:[#allocation2 + $0x1] sm:$0x1] %vm204, %v197
    %207 = vst.msk [vmem:[#allocation2 + $0x2] sm:$0x1] %vm204, %v198
    %208 = vst.msk [vmem:[#allocation2 + $0x3] sm:$0x1] %vm204, %v199
    %209 = vst.msk [vmem:[#allocation2 + $0x4] sm:$0x1] %vm204, %v200
    %210 = vst.msk [vmem:[#allocation2 + $0x5] sm:$0x1] %vm204, %v201
    %211 = vst.msk [vmem:[#allocation2 + $0x6] sm:$0x1] %vm204, %v202
    %212 = vst.msk [vmem:[#allocation2 + $0x7] sm:$0x1] %vm204, %v203
    %v213 = vld [vmem:[#allocation2] sm:$0x1]
    %v214 = vunpack.c.l.bf16 %v213
    %v215 = vld [vmem:[%s3] sm:$0xf]
    %v216 = vld [vmem:[%s3 + $0x4] sm:$0xf]
    %v217 = vld [vmem:[%s3 + $0x8] sm:$0xf]
    %v218 = vld [vmem:[%s3 + $0xc] sm:$0xf]
    %v219 = vld [vmem:[%s5] sm:$0x1]
    %v221 = vperm.slane %v219, 0
    %v227 = vunpack.c.l.b16 %v215
    %v228 = vunpack.c.l.b16 %v216
    %v229 = vunpack.c.l.b16 %v217
    %v230 = vunpack.c.l.b16 %v218
    %v231 = vpack.c.b16 %v228, %v227
    %v232 = vpack.c.b16 %v230, %v229
    %v236 = vsel %vm76, 0, 0
    %238 = vmatpush.bf16.msra.mxu0 0
    %239 = vmatpush.bf16.msra.mxu0 0
    %240 = vmatpush.bf16.msra.mxu0 0
    %241 = vmatpush.bf16.msra.mxu0 0
    %242 = vmatpush.bf16.msra.mxu0 0
    %243 = vmatpush.bf16.msra.mxu0 0
    %244 = vmatpush.bf16.msra.mxu0 %v232
    %245 = vmatpush.bf16.msra.mxu0 %v231
    %246 = vmatmul.bf16.gmra.mxu0 %v236
    %v247 = vpop.f32.mrf.mxu0
    %v248 = vadd.f32 %v221, %v247
    %v249 = vpop.f32.mrf.mxu0
    %250 = vdwg.mxu0
    %v251 = vadd.f32 %v214, %v248
    %v252 = vxor.u32 %v251, 2147483648
    %v253 = vmul.f32 %v252, 1.442695
    %v254 = vpow.pop %v253
    %v255 = vadd.f32 %v254, 1.0
    %v256 = vrcp.pop %v255
    %v257 = vmul.f32 %v255, %v256
    %v258 = vsub.f32 1.0, %v257
    %v259 = vmul.f32 %v256, %v258
    %v260 = vadd.f32 %v256, %v259
    %vm261 = vweird.f32 %v255
    %vm262 = vweird.f32 %v256
    %vm263 = vmor %vm261, %vm262
    %v264 = vsel %vm263, %v256, %v260
    %v265 = vand.u32 2147483647, %v255
    %vm266 = vcmp.eq.f32.partialorder %v265, 8.507059e+37
    %v267 = vand.u32 %v255, 2147483648
    %v268 = vor.u32 1.1754944e-38, %v267
    %v269 = vsel %vm266, %v268, %v264
    %v270 = vmul.f32 1.0, %v269
    %272 = vrot.lane.b32.xlu0 %v248, 64
    %v273 = vpop.permute.xlu0 %272
    %v275 = vmul.f32 %v270, %v273
    %277 = vrot.lane.b32.xlu0 %v275, 64
    %v278 = vpop.permute.xlu0 %277
    %v280 = vadd.f32 %v214, %v278
    %v281 = vtanh.pop %v280
    %v282 = vsub.f32 1.0, %v270
    %284 = vrot.lane.b32.xlu0 %v281, 96
    %v285 = vpop.permute.xlu0 %284
    %v287 = vmul.f32 %v282, %v285
    %v288 = vmul.f32 %v270, 0.0
    %v289 = vadd.f32 %v287, %v288
    %s290 = scalar_lea.vmem [#allocation2], 1
    %v291 = vld [vmem:[%s290] sm:$0x1]
    %v292 = vunpack.c.l.bf16 %v291
    %v293 = vpack.c.bf16 %v289, %v289
    %295 = vrot.lane.b32.xlu0 %v293, 96
    %v296 = vpop.permute.xlu0 %295
    %v298 = vsel %vm76, %v296, 0
    %300 = vmatpush.bf16.msra.mxu0 0
    %301 = vmatpush.bf16.msra.mxu0 0
    %302 = vmatpush.bf16.msra.mxu0 0
    %303 = vmatpush.bf16.msra.mxu0 0
    %304 = vmatpush.bf16.msra.mxu0 0
    %305 = vmatpush.bf16.msra.mxu0 0
    %306 = vmatpush.bf16.msra.mxu0 %v232
    %307 = vmatpush.bf16.msra.mxu0 %v231
    %308 = vmatmul.bf16.gmra.mxu0 %v298
    %v309 = vpop.f32.mrf.mxu0
    %v310 = vadd.f32 %v221, %v309
    %v311 = vpop.f32.mrf.mxu0
    %312 = vdwg.mxu0
    %v313 = vadd.f32 %v292, %v310
    %v314 = vxor.u32 %v313, 2147483648
    %v315 = vmul.f32 %v314, 1.442695
    %v316 = vpow.pop %v315
    %v317 = vadd.f32 %v316, 1.0
    %v318 = vrcp.pop %v317
    %v319 = vmul.f32 %v317, %v318
    %v320 = vsub.f32 1.0, %v319
    %v321 = vmul.f32 %v318, %v320
    %v322 = vadd.f32 %v318, %v321
    %vm323 = vweird.f32 %v317
    %vm324 = vweird.f32 %v318
    %vm325 = vmor %vm323, %vm324
    %v326 = vsel %vm325, %v318, %v322
    %v327 = vand.u32 2147483647, %v317
    %vm328 = vcmp.eq.f32.partialorder %v327, 8.507059e+37
    %v329 = vand.u32 %v317, 2147483648
    %v330 = vor.u32 1.1754944e-38, %v329
    %v331 = vsel %vm328, %v330, %v326
    %v332 = vmul.f32 1.0, %v331
    %334 = vrot.lane.b32.xlu0 %v310, 64
    %v335 = vpop.permute.xlu0 %334
    %v337 = vmul.f32 %v332, %v335
    %339 = vrot.lane.b32.xlu0 %v337, 64
    %v340 = vpop.permute.xlu0 %339
    %v342 = vadd.f32 %v292, %v340
    %v343 = vtanh.pop %v342
    %v344 = vsub.f32 1.0, %v332
    %346 = vrot.lane.b32.xlu0 %v343, 96
    %v347 = vpop.permute.xlu0 %346
    %v349 = vmul.f32 %v344, %v347
    %v350 = vmul.f32 %v332, %v289
    %v351 = vadd.f32 %v349, %v350
    %s352 = scalar_lea.vmem [#allocation2], 2
    %v353 = vld [vmem:[%s352] sm:$0x1]
    %v354 = vunpack.c.l.bf16 %v353
    %v355 = vpack.c.bf16 %v351, %v351
    %357 = vrot.lane.b32.xlu0 %v355, 96
    %v358 = vpop.permute.xlu0 %357
    %v360 = vsel %vm76, %v358, 0
    %362 = vmatpush.bf16.msra.mxu0 0
    %363 = vmatpush.bf16.msra.mxu0 0
    %364 = vmatpush.bf16.msra.mxu0 0
    %365 = vmatpush.bf16.msra.mxu0 0
    %366 = vmatpush.bf16.msra.mxu0 0
    %367 = vmatpush.bf16.msra.mxu0 0
    %368 = vmatpush.bf16.msra.mxu0 %v232
    %369 = vmatpush.bf16.msra.mxu0 %v231
    %370 = vmatmul.bf16.gmra.mxu0 %v360
    %v371 = vpop.f32.mrf.mxu0
    %v372 = vadd.f32 %v221, %v371
    %v373 = vpop.f32.mrf.mxu0
    %374 = vdwg.mxu0
    %v375 = vadd.f32 %v354, %v372
    %v376 = vxor.u32 %v375, 2147483648
    %v377 = vmul.f32 %v376, 1.442695
    %v378 = vpow.pop %v377
    %v379 = vadd.f32 %v378, 1.0
    %v380 = vrcp.pop %v379
    %v381 = vmul.f32 %v379, %v380
    %v382 = vsub.f32 1.0, %v381
    %v383 = vmul.f32 %v380, %v382
    %v384 = vadd.f32 %v380, %v383
    %vm385 = vweird.f32 %v379
    %vm386 = vweird.f32 %v380
    %vm387 = vmor %vm385, %vm386
    %v388 = vsel %vm387, %v380, %v384
    %v389 = vand.u32 2147483647, %v379
    %vm390 = vcmp.eq.f32.partialorder %v389, 8.507059e+37
    %v391 = vand.u32 %v379, 2147483648
    %v392 = vor.u32 1.1754944e-38, %v391
    %v393 = vsel %vm390, %v392, %v388
    %v394 = vmul.f32 1.0, %v393
    %396 = vrot.lane.b32.xlu0 %v372, 64
    %v397 = vpop.permute.xlu0 %396
    %v399 = vmul.f32 %v394, %v397
    %401 = vrot.lane.b32.xlu0 %v399, 64
    %v402 = vpop.permute.xlu0 %401
    %v404 = vadd.f32 %v354, %v402
    %v405 = vtanh.pop %v404
    %v406 = vsub.f32 1.0, %v394
    %408 = vrot.lane.b32.xlu0 %v405, 96
    %v409 = vpop.permute.xlu0 %408
    %v411 = vmul.f32 %v406, %v409
    %v412 = vmul.f32 %v394, %v351
    %v413 = vadd.f32 %v411, %v412
    %s414 = scalar_lea.vmem [#allocation2], 3
    %v415 = vld [vmem:[%s414] sm:$0x1]
    %v416 = vunpack.c.l.bf16 %v415
    %v417 = vpack.c.bf16 %v413, %v413
    %419 = vrot.lane.b32.xlu0 %v417, 96
    %v420 = vpop.permute.xlu0 %419
    %v422 = vsel %vm76, %v420, 0
    %424 = vmatpush.bf16.msra.mxu0 0
    %425 = vmatpush.bf16.msra.mxu0 0
    %426 = vmatpush.bf16.msra.mxu0 0
    %427 = vmatpush.bf16.msra.mxu0 0
    %428 = vmatpush.bf16.msra.mxu0 0
    %429 = vmatpush.bf16.msra.mxu0 0
    %430 = vmatpush.bf16.msra.mxu0 %v232
    %431 = vmatpush.bf16.msra.mxu0 %v231
    %432 = vmatmul.bf16.gmra.mxu0 %v422
    %v433 = vpop.f32.mrf.mxu0
    %v434 = vadd.f32 %v221, %v433
    %v435 = vpop.f32.mrf.mxu0
    %436 = vdwg.mxu0
    %v437 = vadd.f32 %v416, %v434
    %v438 = vxor.u32 %v437, 2147483648
    %v439 = vmul.f32 %v438, 1.442695
    %v440 = vpow.pop %v439
    %v441 = vadd.f32 %v440, 1.0
    %v442 = vrcp.pop %v441
    %v443 = vmul.f32 %v441, %v442
    %v444 = vsub.f32 1.0, %v443
    %v445 = vmul.f32 %v442, %v444
    %v446 = vadd.f32 %v442, %v445
    %vm447 = vweird.f32 %v441
    %vm448 = vweird.f32 %v442
    %vm449 = vmor %vm447, %vm448
    %v450 = vsel %vm449, %v442, %v446
    %v451 = vand.u32 2147483647, %v441
    %vm452 = vcmp.eq.f32.partialorder %v451, 8.507059e+37
    %v453 = vand.u32 %v441, 2147483648
    %v454 = vor.u32 1.1754944e-38, %v453
    %v455 = vsel %vm452, %v454, %v450
    %v456 = vmul.f32 1.0, %v455
    %458 = vrot.lane.b32.xlu0 %v434, 64
    %v459 = vpop.permute.xlu0 %458
    %v461 = vmul.f32 %v456, %v459
    %463 = vrot.lane.b32.xlu0 %v461, 64
    %v464 = vpop.permute.xlu0 %463
    %v466 = vadd.f32 %v416, %v464
    %v467 = vtanh.pop %v466
    %v468 = vsub.f32 1.0, %v456
    %470 = vrot.lane.b32.xlu0 %v467, 96
    %v471 = vpop.permute.xlu0 %470
    %v473 = vmul.f32 %v468, %v471
    %v474 = vmul.f32 %v456, %v413
    %v475 = vadd.f32 %v473, %v474
    %s476 = scalar_lea.vmem [#allocation2], 4
    %v477 = vld [vmem:[%s476] sm:$0x1]
    %v478 = vunpack.c.l.bf16 %v477
    %v479 = vpack.c.bf16 %v475, %v475
    %481 = vrot.lane.b32.xlu0 %v479, 96
    %v482 = vpop.permute.xlu0 %481
    %v484 = vsel %vm76, %v482, 0
    %486 = vmatpush.bf16.msra.mxu0 0
    %487 = vmatpush.bf16.msra.mxu0 0
    %488 = vmatpush.bf16.msra.mxu0 0
    %489 = vmatpush.bf16.msra.mxu0 0
    %490 = vmatpush.bf16.msra.mxu0 0
    %491 = vmatpush.bf16.msra.mxu0 0
    %492 = vmatpush.bf16.msra.mxu0 %v232
    %493 = vmatpush.bf16.msra.mxu0 %v231
    %494 = vmatmul.bf16.gmra.mxu0 %v484
    %v495 = vpop.f32.mrf.mxu0
    %v496 = vadd.f32 %v221, %v495
    %v497 = vpop.f32.mrf.mxu0
    %498 = vdwg.mxu0
    %v499 = vadd.f32 %v478, %v496
    %v500 = vxor.u32 %v499, 2147483648
    %v501 = vmul.f32 %v500, 1.442695
    %v502 = vpow.pop %v501
    %v503 = vadd.f32 %v502, 1.0
    %v504 = vrcp.pop %v503
    %v505 = vmul.f32 %v503, %v504
    %v506 = vsub.f32 1.0, %v505
    %v507 = vmul.f32 %v504, %v506
    %v508 = vadd.f32 %v504, %v507
    %vm509 = vweird.f32 %v503
    %vm510 = vweird.f32 %v504
    %vm511 = vmor %vm509, %vm510
    %v512 = vsel %vm511, %v504, %v508
    %v513 = vand.u32 2147483647, %v503
    %vm514 = vcmp.eq.f32.partialorder %v513, 8.507059e+37
    %v515 = vand.u32 %v503, 2147483648
    %v516 = vor.u32 1.1754944e-38, %v515
    %v517 = vsel %vm514, %v516, %v512
    %v518 = vmul.f32 1.0, %v517
    %520 = vrot.lane.b32.xlu0 %v496, 64
    %v521 = vpop.permute.xlu0 %520
    %v523 = vmul.f32 %v518, %v521
    %525 = vrot.lane.b32.xlu0 %v523, 64
    %v526 = vpop.permute.xlu0 %525
    %v528 = vadd.f32 %v478, %v526
    %v529 = vtanh.pop %v528
    %v530 = vsub.f32 1.0, %v518
    %532 = vrot.lane.b32.xlu0 %v529, 96
    %v533 = vpop.permute.xlu0 %532
    %v535 = vmul.f32 %v530, %v533
    %v536 = vmul.f32 %v518, %v475
    %v537 = vadd.f32 %v535, %v536
    %s538 = scalar_lea.vmem [#allocation2], 5
    %v539 = vld [vmem:[%s538] sm:$0x1]
    %v540 = vunpack.c.l.bf16 %v539
    %v541 = vpack.c.bf16 %v537, %v537
    %543 = vrot.lane.b32.xlu0 %v541, 96
    %v544 = vpop.permute.xlu0 %543
    %v546 = vsel %vm76, %v544, 0
    %548 = vmatpush.bf16.msra.mxu0 0
    %549 = vmatpush.bf16.msra.mxu0 0
    %550 = vmatpush.bf16.msra.mxu0 0
    %551 = vmatpush.bf16.msra.mxu0 0
    %552 = vmatpush.bf16.msra.mxu0 0
    %553 = vmatpush.bf16.msra.mxu0 0
    %554 = vmatpush.bf16.msra.mxu0 %v232
    %555 = vmatpush.bf16.msra.mxu0 %v231
    %556 = vmatmul.bf16.gmra.mxu0 %v546
    %v557 = vpop.f32.mrf.mxu0
    %v558 = vadd.f32 %v221, %v557
    %v559 = vpop.f32.mrf.mxu0
    %560 = vdwg.mxu0
    %v561 = vadd.f32 %v540, %v558
    %v562 = vxor.u32 %v561, 2147483648
    %v563 = vmul.f32 %v562, 1.442695
    %v564 = vpow.pop %v563
    %v565 = vadd.f32 %v564, 1.0
    %v566 = vrcp.pop %v565
    %v567 = vmul.f32 %v565, %v566
    %v568 = vsub.f32 1.0, %v567
    %v569 = vmul.f32 %v566, %v568
    %v570 = vadd.f32 %v566, %v569
    %vm571 = vweird.f32 %v565
    %vm572 = vweird.f32 %v566
    %vm573 = vmor %vm571, %vm572
    %v574 = vsel %vm573, %v566, %v570
    %v575 = vand.u32 2147483647, %v565
    %vm576 = vcmp.eq.f32.partialorder %v575, 8.507059e+37
    %v577 = vand.u32 %v565, 2147483648
    %v578 = vor.u32 1.1754944e-38, %v577
    %v579 = vsel %vm576, %v578, %v574
    %v580 = vmul.f32 1.0, %v579
    %582 = vrot.lane.b32.xlu0 %v558, 64
    %v583 = vpop.permute.xlu0 %582
    %v585 = vmul.f32 %v580, %v583
    %587 = vrot.lane.b32.xlu0 %v585, 64
    %v588 = vpop.permute.xlu0 %587
    %v590 = vadd.f32 %v540, %v588
    %v591 = vtanh.pop %v590
    %v592 = vsub.f32 1.0, %v580
    %594 = vrot.lane.b32.xlu0 %v591, 96
    %v595 = vpop.permute.xlu0 %594
    %v597 = vmul.f32 %v592, %v595
    %v598 = vmul.f32 %v580, %v537
    %v599 = vadd.f32 %v597, %v598
    %s600 = scalar_lea.vmem [#allocation2], 6
    %v601 = vld [vmem:[%s600] sm:$0x1]
    %v602 = vunpack.c.l.bf16 %v601
    %v603 = vpack.c.bf16 %v599, %v599
    %605 = vrot.lane.b32.xlu0 %v603, 96
    %v606 = vpop.permute.xlu0 %605
    %v608 = vsel %vm76, %v606, 0
    %610 = vmatpush.bf16.msra.mxu0 0
    %611 = vmatpush.bf16.msra.mxu0 0
    %612 = vmatpush.bf16.msra.mxu0 0
    %613 = vmatpush.bf16.msra.mxu0 0
    %614 = vmatpush.bf16.msra.mxu0 0
    %615 = vmatpush.bf16.msra.mxu0 0
    %616 = vmatpush.bf16.msra.mxu0 %v232
    %617 = vmatpush.bf16.msra.mxu0 %v231
    %618 = vmatmul.bf16.gmra.mxu0 %v608
    %v619 = vpop.f32.mrf.mxu0
    %v620 = vadd.f32 %v221, %v619
    %v621 = vpop.f32.mrf.mxu0
    %622 = vdwg.mxu0
    %v623 = vadd.f32 %v602, %v620
    %v624 = vxor.u32 %v623, 2147483648
    %v625 = vmul.f32 %v624, 1.442695
    %v626 = vpow.pop %v625
    %v627 = vadd.f32 %v626, 1.0
    %v628 = vrcp.pop %v627
    %v629 = vmul.f32 %v627, %v628
    %v630 = vsub.f32 1.0, %v629
    %v631 = vmul.f32 %v628, %v630
    %v632 = vadd.f32 %v628, %v631
    %vm633 = vweird.f32 %v627
    %vm634 = vweird.f32 %v628
    %vm635 = vmor %vm633, %vm634
    %v636 = vsel %vm635, %v628, %v632
    %v637 = vand.u32 2147483647, %v627
    %vm638 = vcmp.eq.f32.partialorder %v637, 8.507059e+37
    %v639 = vand.u32 %v627, 2147483648
    %v640 = vor.u32 1.1754944e-38, %v639
    %v641 = vsel %vm638, %v640, %v636
    %v642 = vmul.f32 1.0, %v641
    %644 = vrot.lane.b32.xlu0 %v620, 64
    %v645 = vpop.permute.xlu0 %644
    %v647 = vmul.f32 %v642, %v645
    %649 = vrot.lane.b32.xlu0 %v647, 64
    %v650 = vpop.permute.xlu0 %649
    %v652 = vadd.f32 %v602, %v650
    %v653 = vtanh.pop %v652
    %v654 = vsub.f32 1.0, %v642
    %656 = vrot.lane.b32.xlu0 %v653, 96
    %v657 = vpop.permute.xlu0 %656
    %v659 = vmul.f32 %v654, %v657
    %v660 = vmul.f32 %v642, %v599
    %v661 = vadd.f32 %v659, %v660
    %s662 = scalar_lea.vmem [#allocation2], 7
    %v663 = vld [vmem:[%s662] sm:$0x1]
    %v664 = vunpack.c.l.bf16 %v663
    %v665 = vpack.c.bf16 %v661, %v661
    %667 = vrot.lane.b32.xlu0 %v665, 96
    %v668 = vpop.permute.xlu0 %667
    %v670 = vsel %vm76, %v668, 0
    %672 = vmatpush.bf16.msra.mxu0 0
    %673 = vmatpush.bf16.msra.mxu0 0
    %674 = vmatpush.bf16.msra.mxu0 0
    %675 = vmatpush.bf16.msra.mxu0 0
    %676 = vmatpush.bf16.msra.mxu0 0
    %677 = vmatpush.bf16.msra.mxu0 0
    %678 = vmatpush.bf16.msra.mxu0 %v232
    %679 = vmatpush.bf16.msra.mxu0 %v231
    %680 = vmatmul.bf16.gmra.mxu0 %v670
    %v681 = vpop.f32.mrf.mxu0
    %v682 = vadd.f32 %v221, %v681
    %v683 = vpop.f32.mrf.mxu0
    %684 = vdwg.mxu0
    %v685 = vadd.f32 %v664, %v682
    %v686 = vxor.u32 %v685, 2147483648
    %v687 = vmul.f32 %v686, 1.442695
    %v688 = vpow.pop %v687
    %v689 = vadd.f32 %v688, 1.0
    %v690 = vrcp.pop %v689
    %v691 = vmul.f32 %v689, %v690
    %v692 = vsub.f32 1.0, %v691
    %v693 = vmul.f32 %v690, %v692
    %v694 = vadd.f32 %v690, %v693
    %vm695 = vweird.f32 %v689
    %vm696 = vweird.f32 %v690
    %vm697 = vmor %vm695, %vm696
    %v698 = vsel %vm697, %v690, %v694
    %v699 = vand.u32 2147483647, %v689
    %vm700 = vcmp.eq.f32.partialorder %v699, 8.507059e+37
    %v701 = vand.u32 %v689, 2147483648
    %v702 = vor.u32 1.1754944e-38, %v701
    %v703 = vsel %vm700, %v702, %v698
    %v704 = vmul.f32 1.0, %v703
    %706 = vrot.lane.b32.xlu0 %v682, 64
    %v707 = vpop.permute.xlu0 %706
    %v709 = vmul.f32 %v704, %v707
    %711 = vrot.lane.b32.xlu0 %v709, 64
    %v712 = vpop.permute.xlu0 %711
    %v714 = vadd.f32 %v664, %v712
    %v715 = vtanh.pop %v714
    %v716 = vsub.f32 1.0, %v704
    %718 = vrot.lane.b32.xlu0 %v715, 96
    %v719 = vpop.permute.xlu0 %718
    %v721 = vmul.f32 %v716, %v719
    %v722 = vmul.f32 %v704, %v661
    %v723 = vadd.f32 %v721, %v722
    %v724 = vpack.c.bf16 %v723, %v723
    %v725 = vld [vmem:[%s7] sm:$0xf]
    %v726 = vld [vmem:[%s7 + $0x4] sm:$0xf]
    %v727 = vld [vmem:[%s7 + $0x8] sm:$0xf]
    %v728 = vld [vmem:[%s7 + $0xc] sm:$0xf]
    %730 = vrot.lane.b32.xlu0 %v724, 96
    %v731 = vpop.permute.xlu0 %730
    %v736 = vunpack.c.l.b16 %v725
    %v737 = vunpack.c.l.b16 %v726
    %v738 = vunpack.c.l.b16 %v727
    %v739 = vunpack.c.l.b16 %v728
    %v740 = vpack.c.b16 %v737, %v736
    %v741 = vpack.c.b16 %v739, %v738
    %v745 = vsel %vm76, %v731, 0
    %747 = vmatpush.bf16.msra.mxu0 0
    %748 = vmatpush.bf16.msra.mxu0 0
    %749 = vmatpush.bf16.msra.mxu0 0
    %750 = vmatpush.bf16.msra.mxu0 0
    %751 = vmatpush.bf16.msra.mxu0 0
    %752 = vmatpush.bf16.msra.mxu0 0
    %753 = vmatpush.bf16.msra.mxu0 %v741
    %754 = vmatpush.bf16.msra.mxu0 %v740
    %755 = vmatmul.bf16.gmra.mxu0 %v745
    %v756 = vpop.f32.mrf.mxu0
    %v757 = vadd.f32 0.0, %v756
    %v758 = vpop.f32.mrf.mxu0
    %759 = vdwg.mxu0
    %v760 = vld [vmem:[#allocation3] sm:$0xff]
    %v761 = vld [vmem:[#allocation3 + $0x8] sm:$0xff]
    %v763 = vrot.slane %v757, 1
    %v764 = vperm.slane %v757, 0
    %v765 = vperm.slane %v763, 0
    %v768 = vadd.f32 %v760, %v764
    %v769 = vadd.f32 %v761, %v765
    %v770 = vmax.f32 %v768, 0.0
    %v771 = vmax.f32 %v769, 0.0
    %v772 = vld [vmem:[%s9] sm:$0x1]
    %v774 = vperm.slane %v772, 0
    %v776 = vmul.f32 %v770, %v774
    %v777 = vmul.f32 %v771, %v774
    %v778 = vsel %vm76, %v776, 0.0
    %779 = vadd.xlane.f32.xlu0 %v778
    %v780 = vpop.xlane.xlu0 %779
    %v781 = vsel %vm76, %v777, 0.0
    %782 = vadd.xlane.f32.xlu0 %v781
    %v783 = vpop.xlane.xlu0 %782
    %v786 = vlaneseq
    %v787 = vand.u32 %v786, 127
    %v788 = vperm.slane %v780, %v787
    %v789 = vperm.slane %v783, %v787
    %vm790 = vcmask 1041409
    %v791 = vsel %vm790, %v789, %v788
    %vm793 = vcmask 58368
    %v794 = vsel %vm793, %v791, -inf
    %795 = vmax.xlane.f32.xlu0 %v794
    %v796 = vpop.xlane.xlu0 %795
    %v798 = vperm.slane %v796, 0
    %v799 = vperm.slane %v796, 1
    %v802 = vsub.f32 %v780, %v798
    %v803 = vsub.f32 %v783, %v799
    %v804 = vmul.f32 %v802, 1.442695
    %v805 = vpow.pop %v804
    %v806 = vmul.f32 %v803, 1.442695
    %v807 = vpow.pop %v806
    %810 = vset.pattern.permute.xlu0 0
    %811 = vperm.xlu0 %810, %v805
    %v812 = vpop.permute.xlu0 %811
    %813 = vset.pattern.permute.xlu0 0
    %814 = vperm.xlu0 %813, %v807
    %v815 = vpop.permute.xlu0 %814
    %v816 = vperm.slane %v812, %v787
    %v817 = vperm.slane %v815, %v787
    %v818 = vsel %vm790, %v817, %v816
    %v820 = vsel %vm793, %v818, 0.0
    %821 = vadd.xlane.f32.xlu0 %v820
    %v822 = vpop.xlane.xlu0 %821
    %v823 = vrcp.pop %v822
    %v825 = vperm.slane %v823, 0
    %v826 = vperm.slane %v823, 1
    %v829 = vmul.f32 %v805, %v825
    %v830 = vmul.f32 %v807, %v826
    %v831 = vld [vmem:[%s1] sm:$0xf]
    %v832 = vld [vmem:[%s1 + $0x4] sm:$0xf]
    %v833 = vunpack.c.l.bf16 %v831
    %v834 = vunpack.c.l.bf16 %v832
    %836 = vset.pattern.permute.xlu0 0
    %837 = vperm.xlu0 %836, %v829
    %v838 = vpop.permute.xlu0 %837
    %841 = vset.pattern.permute.xlu0 0
    %842 = vperm.xlu0 %841, %v830
    %v843 = vpop.permute.xlu0 %842
    %v845 = vmul.f32 %v838, %v833
    %v846 = vmul.f32 %v843, %v834
    %v847 = vsel %vm76, %v845, 0.0
    %v848 = vrot.slane %v847, 4
    %v849 = vadd.f32 %v847, %v848
    %v850 = vrot.slane %v849, 2
    %v851 = vadd.f32 %v849, %v850
    %v852 = vrot.slane %v851, 1
    %v853 = vadd.f32 %v851, %v852
    %v854 = vsel %vm76, %v846, 0.0
    %v855 = vrot.slane %v854, 4
    %v856 = vadd.f32 %v854, %v855
    %v857 = vrot.slane %v856, 2
    %v858 = vadd.f32 %v856, %v857
    %v859 = vrot.slane %v858, 1
    %v860 = vadd.f32 %v858, %v859
    %v861 = vld [vmem:[%s10] sm:$0xf]
    %v862 = vld [vmem:[%s10 + $0x4] sm:$0xf]
    %v863 = vld [vmem:[%s10 + $0x8] sm:$0xf]
    %v864 = vld [vmem:[%s10 + $0xc] sm:$0xf]
    %v865 = vld [vmem:[%s11] sm:$0x1]
    %v867 = vperm.slane %v865, 0
    %v873 = vunpack.c.l.b16 %v861
    %v874 = vunpack.c.l.b16 %v862
    %v875 = vunpack.c.l.b16 %v863
    %v876 = vunpack.c.l.b16 %v864
    %v877 = vpack.c.b16 %v874, %v873
    %v878 = vpack.c.b16 %v876, %v875
    %881 = vmatpush.bf16.msra.mxu0 0
    %882 = vmatpush.bf16.msra.mxu0 0
    %883 = vmatpush.bf16.msra.mxu0 0
    %884 = vmatpush.bf16.msra.mxu0 0
    %885 = vmatpush.bf16.msra.mxu0 0
    %886 = vmatpush.bf16.msra.mxu0 0
    %887 = vmatpush.bf16.msra.mxu0 %v878
    %888 = vmatpush.bf16.msra.mxu0 %v877
    %889 = vmatmul.bf16.gmra.mxu0 %v745
    %v890 = vpop.f32.mrf.mxu0
    %v891 = vadd.f32 %v867, %v890
    %v892 = vpop.f32.mrf.mxu0
    %893 = vdwg.mxu0
    %v894 = vmax.f32 %v891, 0.0
    %v895 = vpack.c.bf16 %v853, %v853
    %v896 = vpack.c.bf16 %v860, %v860
    %v897 = vld [vmem:[%s12] sm:$0xf]
    %v898 = vld [vmem:[%s12 + $0x4] sm:$0xf]
    %v899 = vld [vmem:[%s12 + $0x8] sm:$0xf]
    %v900 = vld [vmem:[%s12 + $0xc] sm:$0xf]
    %v901 = vld [vmem:[%s13] sm:$0x1]
    %v903 = vperm.slane %v901, 0
    %v907 = vunpack.c.l.b16 %v895
    %v908 = vunpack.c.l.b16 %v896
    %v909 = vsel %vm790, %v908, %v907
    %v910 = vpack.c.b16 %v909, %v909
    %v915 = vunpack.c.l.b16 %v897
    %v916 = vunpack.c.l.b16 %v898
    %v917 = vunpack.c.l.b16 %v899
    %v918 = vunpack.c.l.b16 %v900
    %v919 = vpack.c.b16 %v916, %v915
    %v920 = vpack.c.b16 %v918, %v917
    %v924 = vsel %vm76, %v910, 0
    %926 = vmatpush.bf16.msra.mxu0 0
    %927 = vmatpush.bf16.msra.mxu0 0
    %928 = vmatpush.bf16.msra.mxu0 0
    %929 = vmatpush.bf16.msra.mxu0 0
    %930 = vmatpush.bf16.msra.mxu0 0
    %931 = vmatpush.bf16.msra.mxu0 0
    %932 = vmatpush.bf16.msra.mxu0 %v920
    %933 = vmatpush.bf16.msra.mxu0 %v919
    %934 = vmatmul.bf16.gmra.mxu0 %v924
    %v935 = vpop.f32.mrf.mxu0
    %v936 = vadd.f32 %v903, %v935
    %v937 = vpop.f32.mrf.mxu0
    %938 = vdwg.mxu0
    %v939 = vmax.f32 %v936, 0.0
    %v940 = vmul.f32 %v894, %v939
    %vm941 = vcmask 254976
    %942 = vst.msk [vmem:[#allocation4] sm:$0x3] %vm941, %v940
    // Predicated region
    $region58: #{base_model_forward.1} parent=1 // pred_check
      _
    $region59: #{base_model_forward.1} parent=1 // pred_check_branch
      %944 = sbr.rel (0) target = $region61
    $region60: #{base_model_forward.1} parent=1 // pred_region
      %946 = vsyncadd [#allocation5], 0
      %s948 = sshll.u32 [#allocation4], 4
      %s949 = int_to_ptr.vmem [resolvable:$true] %s948
      %s950 = sshll.u32 %s14, 4
      %s951 = int_to_ptr.hbm [resolvable:$true] %s950
      %953 = dma.vmem_to_hbm [thread:$0]  %s949, 32, %s951, [#allocation5]
    $region61: #{base_model_forward.1} parent=1 // pred_fallthru
      _
    // Predicated region
    $region62: #{base_model_forward.1} parent=1 // pred_check
      _
    $region63: #{base_model_forward.1} parent=1 // pred_check_branch
      %955 = sbr.rel (0) target = $region65
    $region64: #{base_model_forward.1} parent=1 // pred_region
      %957 = dma.done [#allocation5], 32
    $region65: #{base_model_forward.1} parent=1 // pred_fallthru
      _
    %958 = vsyncpa [#allocation5], 1

</llo_original>
